<compile_context>
chip_gen: v5e
topology: v5e:2x2
jax: 0.10.0
libtpu: 0.0.40
codegen_flags: <defaults>
</compile_context>

<pallas_src>
import jax
import jax.numpy as jnp
from jax import lax
from jax.experimental import pallas as pl
from jax.experimental.pallas import tpu as pltpu
import numpy as np

B_BLOCK = 8  # sublane-aligned batch tile; one grid program per block ("parallel" axis)


def encoder_rnn_kernel(x_ref, wx_ref, blin_ref, whr_ref, wcr_ref,
                       wcat_ref, bias_ref, x_atn_ref, x_enc_ref):
    Tm1, B, F = x_ref.shape
    H = x_enc_ref.shape[-1]

    w_hr = whr_ref[...]        # (1, H)   lin weight, h part (row layout -> VPU)
    w_cr = wcr_ref[...]        # (1, H)   lin weight, c part
    w_cat = wcat_ref[...]      # (F+H, 4H) bf16 fused [W_ih^T ; W_hh^T]
    bias = bias_ref[...]       # (1, 4H)  b_ih + b_hh (precomputed in wrapper)

    # Attention-score contribution from x is time-invariant:
    #   x_score[b, f] = sum_t x[t, b, f] * w_x[t]   (+ lin bias folded in once)
    x_score = (jnp.sum(x_ref[...] * wx_ref[...][:, :, None], axis=0)
               + blin_ref[...])                                      # (B, F)

    def step(t, carry):
        h, c = carry                                                 # f32 (B, H) each

        # lin([h, c, x_f]) score: h/c parts on the VPU + lane reduce (no N=1 MXU matmul).
        s_hc = jnp.sum(h * w_hr + c * w_cr, axis=1, keepdims=True)   # (B, 1)
        scores = s_hc + x_score                                      # (B, F)

        # softmax over the feature axis (max-stabilized, approx reciprocal on the EUP)
        scores = scores - jnp.max(scores, axis=1, keepdims=True)
        e = jnp.exp(scores)
        a = e * pl.reciprocal(jnp.sum(e, axis=1, keepdims=True), approx=True)

        x_t = x_ref[t]                                               # (B, F)
        x_atn_t = a * x_t                                            # (B, F)

        # One LSTM cell step with fused input/recurrent matmul:
        #   gates = [x_atn_t, h] @ [W_ih^T ; W_hh^T] + (b_ih + b_hh)
        xin = jnp.concatenate([x_atn_t, h], axis=1).astype(jnp.bfloat16)   # (B, F+H)
        gates = jnp.dot(xin, w_cat, preferred_element_type=jnp.float32) + bias  # (B, 4H)
        i_g = jax.nn.sigmoid(gates[:, 0 * H:1 * H])
        f_g = jax.nn.sigmoid(gates[:, 1 * H:2 * H])
        g_g = jnp.tanh(gates[:, 2 * H:3 * H])
        o_g = jax.nn.sigmoid(gates[:, 3 * H:4 * H])
        c_new = f_g * c + i_g * g_g
        h_new = o_g * jnp.tanh(c_new)

        x_atn_ref[t] = x_atn_t.astype(x_atn_ref.dtype)
        x_enc_ref[t] = h_new.astype(x_enc_ref.dtype)
        return (h_new, c_new)

    h0 = jnp.zeros((B, H), jnp.float32)
    c0 = jnp.zeros((B, H), jnp.float32)
    lax.fori_loop(0, Tm1, step, (h0, c0), unroll=True)


def encoder_rnn_forward(x, params):
    """x: (B, T-1, F) like the PyTorch module input. Returns (x_atn, x_enc)."""
    B, Tm1, F = x.shape
    H = params["lstm_w_hh"].shape[1]   # (4H, H) -> H

    # ---- one-time preprocessing (outside the recurrence) ----
    x_tm = jnp.transpose(x, (1, 0, 2)).astype(jnp.float32)            # (T-1, B, F)
    B_pad = ((B + B_BLOCK - 1) // B_BLOCK) * B_BLOCK
    if B_pad != B:
        x_tm = jnp.pad(x_tm, ((0, 0), (0, B_pad - B), (0, 0)))        # fill sublanes

    lin_w = params["lin_w"].astype(jnp.float32)                       # (1, 2H + T-1)
    w_hr = lin_w[:, :H]                                               # (1, H)
    w_cr = lin_w[:, H:2 * H]                                          # (1, H)
    w_x = jnp.transpose(lin_w[:, 2 * H:])                             # (T-1, 1)
    blin = params["lin_b"].reshape(1, 1).astype(jnp.float32)          # (1, 1)

    # Fused LSTM weights (bf16 MXU operands, f32 accumulate) and fused bias.
    w_cat = jnp.concatenate(
        [jnp.transpose(params["lstm_w_ih"]),                          # (F, 4H)
         jnp.transpose(params["lstm_w_hh"])],                         # (H, 4H)
        axis=0).astype(jnp.bfloat16)                                  # (F+H, 4H)
    bias = (params["lstm_b_ih"] + params["lstm_b_hh"]).reshape(1, -1).astype(jnp.float32)

    grid = (B_pad // B_BLOCK,)
    full2d = lambda shape: pl.BlockSpec(shape, lambda b: (0, 0))      # whole-array block

    x_atn_tm, x_enc_tm = pl.pallas_call(
        encoder_rnn_kernel,
        out_shape=(jax.ShapeDtypeStruct((Tm1, B_pad, F), jnp.float32),
                   jax.ShapeDtypeStruct((Tm1, B_pad, H), jnp.float32)),
        grid=grid,
        in_specs=[
            pl.BlockSpec((Tm1, B_BLOCK, F), lambda b: (0, b, 0)),     # x (batch-blocked)
            full2d((Tm1, 1)),                                         # w_x
            full2d((1, 1)),                                           # lin bias
            full2d((1, H)),                                           # w_h row
            full2d((1, H)),                                           # w_c row
            full2d((F + H, 4 * H)),                                   # fused LSTM weight
            full2d((1, 4 * H)),                                       # fused LSTM bias
        ],
        out_specs=(
            pl.BlockSpec((Tm1, B_BLOCK, F), lambda b: (0, b, 0)),
            pl.BlockSpec((Tm1, B_BLOCK, H), lambda b: (0, b, 0)),
        ),
        compiler_params=pltpu.CompilerParams(
            dimension_semantics=("parallel",),        # batch blocks split across TCs (v7x)
            vmem_limit_bytes=32 * 1024 * 1024),
    )(x_tm, w_x, blin, w_hr, w_cr, w_cat, bias)

    x_atn = jnp.transpose(x_atn_tm[:, :B, :], (1, 0, 2))              # (B, T-1, F)
    x_enc = jnp.transpose(x_enc_tm[:, :B, :], (1, 0, 2))              # (B, T-1, H)
    return x_atn, x_enc


def reference_forward(x, params):
    """Pure-JAX (f32) port of the PyTorch forward for verification."""
    B, Tm1, F = x.shape
    W, b = params["lin_w"], params["lin_b"]
    Wih, Whh = params["lstm_w_ih"], params["lstm_w_hh"]
    bih, bhh = params["lstm_b_ih"], params["lstm_b_hh"]
    H = Whh.shape[1]

    h = jnp.zeros((B, H), jnp.float32)
    c = jnp.zeros((B, H), jnp.float32)
    xp = jnp.transpose(x, (0, 2, 1))                     # (B, F, T-1)
    x_atn, x_enc = [], []
    for t in range(Tm1):
        h_rep = jnp.broadcast_to(h[:, None, :], (B, F, H))
        c_rep = jnp.broadcast_to(c[:, None, :], (B, F, H))
        e = jnp.concatenate([h_rep, c_rep, xp], axis=2)  # (B, F, 2H+T-1)
        scores = (e.reshape(-1, 2 * H + Tm1) @ W.T + b).reshape(B, F)
        a = jax.nn.softmax(scores, axis=1)
        x_atn_t = a * x[:, t, :]
        gates = x_atn_t @ Wih.T + bih + h @ Whh.T + bhh
        i_g = jax.nn.sigmoid(gates[:, :H])
        f_g = jax.nn.sigmoid(gates[:, H:2 * H])
        g_g = jnp.tanh(gates[:, 2 * H:3 * H])
        o_g = jax.nn.sigmoid(gates[:, 3 * H:])
        c = f_g * c + i_g * g_g
        h = o_g * jnp.tanh(c)
        x_atn.append(x_atn_t)
        x_enc.append(h)
    return jnp.stack(x_atn, axis=1), jnp.stack(x_enc, axis=1)


def init_params(key, features, hidden, T):
    """Deterministic synthetic parameters matching the PyTorch module's shapes."""
    ks = jax.random.split(key, 6)
    return {
        "lin_w": 0.1 * jax.random.normal(ks[0], (1, 2 * hidden + T - 1), jnp.float32),
        "lin_b": 0.1 * jax.random.normal(ks[1], (1,), jnp.float32),
        "lstm_w_ih": 0.1 * jax.random.normal(ks[2], (4 * hidden, features), jnp.float32),
        "lstm_w_hh": 0.1 * jax.random.normal(ks[3], (4 * hidden, hidden), jnp.float32),
        "lstm_b_ih": 0.1 * jax.random.normal(ks[4], (4 * hidden,), jnp.float32),
        "lstm_b_hh": 0.1 * jax.random.normal(ks[5], (4 * hidden,), jnp.float32),
    }


if __name__ == "__main__":
    B, F, H, T = 2, 4, 32, 9          # batch, features, hidden_size, T  (x has T-1 time steps)
    key = jax.random.PRNGKey(0)
    kx, kp = jax.random.split(key)
    x = jax.random.normal(kx, (B, T - 1, F), jnp.float32)
    params = init_params(kp, F, H, T)

    x_atn, x_enc = encoder_rnn_forward(x, params)
    jax.block_until_ready((x_atn, x_enc))

    ref_atn, ref_enc = reference_forward(x, params)
    assert x_atn.shape == (B, T - 1, F) and x_enc.shape == (B, T - 1, H)
    # bf16 MXU operands + approx reciprocal -> slightly relaxed tolerance vs. f32 reference.
    np.testing.assert_allclose(np.asarray(x_atn), np.asarray(ref_atn), rtol=1e-2, atol=1e-2)
    np.testing.assert_allclose(np.asarray(x_enc), np.asarray(ref_enc), rtol=1e-2, atol=1e-2)

    print("KERNEL_OK")
</pallas_src>

<mosaic_0001>
module attributes {stable_mosaic.version = 11 : i64} {
  func.func @encoder_rnn_kernel(%arg0: i32, %arg1: memref<8x8x4xf32, #tpu.memory_space<vmem>>, %arg2: memref<8x1xf32, #tpu.memory_space<vmem>>, %arg3: memref<1x1xf32, #tpu.memory_space<vmem>>, %arg4: memref<1x32xf32, #tpu.memory_space<vmem>>, %arg5: memref<1x32xf32, #tpu.memory_space<vmem>>, %arg6: memref<36x128xbf16, #tpu.memory_space<vmem>>, %arg7: memref<1x128xf32, #tpu.memory_space<vmem>>, %arg8: memref<8x8x4xf32, #tpu.memory_space<vmem>>, %arg9: memref<8x8x32xf32, #tpu.memory_space<vmem>>) attributes {dimension_semantics = [#tpu.dimension_semantics<parallel>], iteration_bounds = array<i64: 1>, scalar_prefetch = 0 : i64, scratch_operands = 0 : i64, tpu.core_type = #tpu.core_type<tc>, window_params = [{transform_indices = @transform_0, window_bounds = array<i64: 8, 8, 4>}, {pipeline_mode = #tpu.pipeline_mode<synchronous>, transform_indices = @transform_1, window_bounds = array<i64: 8, 1>}, {pipeline_mode = #tpu.pipeline_mode<synchronous>, transform_indices = @transform_2, window_bounds = array<i64: 1, 1>}, {pipeline_mode = #tpu.pipeline_mode<synchronous>, transform_indices = @transform_3, window_bounds = array<i64: 1, 32>}, {pipeline_mode = #tpu.pipeline_mode<synchronous>, transform_indices = @transform_4, window_bounds = array<i64: 1, 32>}, {pipeline_mode = #tpu.pipeline_mode<synchronous>, transform_indices = @transform_5, window_bounds = array<i64: 36, 128>}, {pipeline_mode = #tpu.pipeline_mode<synchronous>, transform_indices = @transform_6, window_bounds = array<i64: 1, 128>}, {transform_indices = @transform_7, window_bounds = array<i64: 8, 8, 4>}, {transform_indices = @transform_8, window_bounds = array<i64: 8, 8, 32>}]} {
    %c0 = arith.constant 0 : index
    %c0_0 = arith.constant 0 : index
    %0 = vector.load %arg4[%c0, %c0_0] : memref<1x32xf32, #tpu.memory_space<vmem>>, vector<1x32xf32>
    %c0_1 = arith.constant 0 : index
    %c0_2 = arith.constant 0 : index
    %1 = vector.load %arg5[%c0_1, %c0_2] : memref<1x32xf32, #tpu.memory_space<vmem>>, vector<1x32xf32>
    %c0_3 = arith.constant 0 : index
    %c0_4 = arith.constant 0 : index
    %2 = vector.load %arg6[%c0_3, %c0_4] : memref<36x128xbf16, #tpu.memory_space<vmem>>, vector<36x128xbf16>
    %c0_5 = arith.constant 0 : index
    %c0_6 = arith.constant 0 : index
    %3 = vector.load %arg7[%c0_5, %c0_6] : memref<1x128xf32, #tpu.memory_space<vmem>>, vector<1x128xf32>
    %c0_7 = arith.constant 0 : index
    %c0_8 = arith.constant 0 : index
    %c0_9 = arith.constant 0 : index
    %4 = vector.load %arg1[%c0_7, %c0_8, %c0_9] : memref<8x8x4xf32, #tpu.memory_space<vmem>>, vector<8x8x4xf32>
    %c0_10 = arith.constant 0 : index
    %c0_11 = arith.constant 0 : index
    %5 = vector.load %arg2[%c0_10, %c0_11] : memref<8x1xf32, #tpu.memory_space<vmem>>, vector<8x1xf32>
    %6 = vector.shape_cast %5 : vector<8x1xf32> to vector<8x1x1xf32>
    %7 = vector.broadcast %6 : vector<8x1x1xf32> to vector<8x8x4xf32>
    %8 = arith.mulf %4, %7 : vector<8x8x4xf32>
    %cst = arith.constant dense<0.000000e+00> : vector<8x4xf32>
    %9 = vector.multi_reduction <add>, %8, %cst [0] : vector<8x8x4xf32> to vector<8x4xf32>
    %c0_12 = arith.constant 0 : index
    %c0_13 = arith.constant 0 : index
    %10 = vector.load %arg3[%c0_12, %c0_13] : memref<1x1xf32, #tpu.memory_space<vmem>>, vector<1x1xf32>
    %11 = vector.broadcast %10 : vector<1x1xf32> to vector<8x4xf32>
    %12 = arith.addf %9, %11 : vector<8x4xf32>
    %cst_14 = arith.constant 0.000000e+00 : f32
    %13 = vector.broadcast %cst_14 : f32 to vector<8x32xf32>
    %cst_15 = arith.constant 0.000000e+00 : f32
    %14 = vector.broadcast %cst_15 : f32 to vector<8x32xf32>
    %c0_i32 = arith.constant 0 : i32
    %15 = vector.broadcast %0 : vector<1x32xf32> to vector<8x32xf32>
    %16 = arith.mulf %13, %15 : vector<8x32xf32>
    %17 = vector.broadcast %1 : vector<1x32xf32> to vector<8x32xf32>
    %18 = arith.mulf %14, %17 : vector<8x32xf32>
    %19 = arith.addf %16, %18 : vector<8x32xf32>
    %cst_16 = arith.constant dense<0.000000e+00> : vector<8xf32>
    %20 = vector.multi_reduction <add>, %19, %cst_16 [1] : vector<8x32xf32> to vector<8xf32>
    %21 = vector.shape_cast %20 : vector<8xf32> to vector<8x1xf32>
    %22 = vector.broadcast %21 : vector<8x1xf32> to vector<8x4xf32>
    %23 = arith.addf %22, %12 : vector<8x4xf32>
    %cst_17 = arith.constant dense<0xFF800000> : vector<8xf32>
    %24 = vector.multi_reduction <maximumf>, %23, %cst_17 [1] : vector<8x4xf32> to vector<8xf32>
    %25 = vector.shape_cast %24 : vector<8xf32> to vector<8x1xf32>
    %26 = vector.broadcast %25 : vector<8x1xf32> to vector<8x4xf32>
    %27 = arith.subf %23, %26 : vector<8x4xf32>
    %28 = math.exp %27 : vector<8x4xf32>
    %cst_18 = arith.constant dense<0.000000e+00> : vector<8xf32>
    %29 = vector.multi_reduction <add>, %28, %cst_18 [1] : vector<8x4xf32> to vector<8xf32>
    %30 = vector.shape_cast %29 : vector<8xf32> to vector<8x1xf32>
    %31 = tpu.reciprocal %30 {approx = true} : vector<8x1xf32> -> vector<8x1xf32>
    %32 = vector.broadcast %31 : vector<8x1xf32> to vector<8x4xf32>
    %33 = arith.mulf %28, %32 : vector<8x4xf32>
    %34 = arith.index_cast %c0_i32 : i32 to index
    %c0_19 = arith.constant 0 : index
    %c0_20 = arith.constant 0 : index
    %35 = vector.load %arg1[%34, %c0_19, %c0_20] : memref<8x8x4xf32, #tpu.memory_space<vmem>>, vector<1x8x4xf32>
    %36 = vector.shape_cast %35 : vector<1x8x4xf32> to vector<8x4xf32>
    %37 = arith.mulf %33, %36 : vector<8x4xf32>
    %38 = tpu.concatenate %37, %13 in 1 : vector<8x4xf32>, vector<8x32xf32> -> vector<8x36xf32>
    %39 = arith.truncf %38 : vector<8x36xf32> to vector<8x36xbf16>
    %cst_21 = arith.constant dense<0.000000e+00> : vector<8x128xf32>
    %40 = tpu.matmul %39, %2, %cst_21 {dimension_numbers = #tpu.dot_dimension_numbers<[1], [0], [0], [1], [0, 0, 1, 1], [], []>} : vector<8x36xbf16>, vector<36x128xbf16>, vector<8x128xf32> -> vector<8x128xf32>
    %41 = vector.broadcast %3 : vector<1x128xf32> to vector<8x128xf32>
    %42 = arith.addf %40, %41 : vector<8x128xf32>
    %43 = vector.extract_strided_slice %42 {offsets = [0, 0], sizes = [8, 32], strides = [1, 1]} : vector<8x128xf32> to vector<8x32xf32>
    %44 = arith.negf %43 : vector<8x32xf32>
    %45 = math.exp %44 : vector<8x32xf32>
    %cst_22 = arith.constant 1.000000e+00 : f32
    %46 = vector.broadcast %cst_22 : f32 to vector<8x32xf32>
    %47 = arith.addf %46, %45 : vector<8x32xf32>
    %48 = arith.divf %46, %47 : vector<8x32xf32>
    %49 = vector.extract_strided_slice %42 {offsets = [0, 32], sizes = [8, 32], strides = [1, 1]} : vector<8x128xf32> to vector<8x32xf32>
    %50 = arith.negf %49 : vector<8x32xf32>
    %51 = math.exp %50 : vector<8x32xf32>
    %cst_23 = arith.constant 1.000000e+00 : f32
    %52 = vector.broadcast %cst_23 : f32 to vector<8x32xf32>
    %53 = arith.addf %52, %51 : vector<8x32xf32>
    %54 = arith.divf %52, %53 : vector<8x32xf32>
    %55 = vector.extract_strided_slice %42 {offsets = [0, 64], sizes = [8, 32], strides = [1, 1]} : vector<8x128xf32> to vector<8x32xf32>
    %56 = math.tanh %55 : vector<8x32xf32>
    %57 = vector.extract_strided_slice %42 {offsets = [0, 96], sizes = [8, 32], strides = [1, 1]} : vector<8x128xf32> to vector<8x32xf32>
    %58 = arith.negf %57 : vector<8x32xf32>
    %59 = math.exp %58 : vector<8x32xf32>
    %cst_24 = arith.constant 1.000000e+00 : f32
    %60 = vector.broadcast %cst_24 : f32 to vector<8x32xf32>
    %61 = arith.addf %60, %59 : vector<8x32xf32>
    %62 = arith.divf %60, %61 : vector<8x32xf32>
    %63 = arith.mulf %54, %14 : vector<8x32xf32>
    %64 = arith.mulf %48, %56 : vector<8x32xf32>
    %65 = arith.addf %63, %64 : vector<8x32xf32>
    %66 = math.tanh %65 : vector<8x32xf32>
    %67 = arith.mulf %62, %66 : vector<8x32xf32>
    %68 = arith.index_cast %c0_i32 : i32 to index
    %c0_25 = arith.constant 0 : index
    %c0_26 = arith.constant 0 : index
    %69 = vector.load %arg8[%68, %c0_25, %c0_26] : memref<8x8x4xf32, #tpu.memory_space<vmem>>, vector<1x8x4xf32>
    %70 = vector.shape_cast %69 : vector<1x8x4xf32> to vector<8x4xf32>
    %71 = vector.shape_cast %37 : vector<8x4xf32> to vector<1x8x4xf32>
    tpu.vector_store %arg8[%68, %c0_25, %c0_26], %71 {strides = array<i32>} : memref<8x8x4xf32, #tpu.memory_space<vmem>>, vector<1x8x4xf32>,
    %72 = arith.index_cast %c0_i32 : i32 to index
    %c0_27 = arith.constant 0 : index
    %c0_28 = arith.constant 0 : index
    %73 = vector.load %arg9[%72, %c0_27, %c0_28] : memref<8x8x32xf32, #tpu.memory_space<vmem>>, vector<1x8x32xf32>
    %74 = vector.shape_cast %73 : vector<1x8x32xf32> to vector<8x32xf32>
    %75 = vector.shape_cast %67 : vector<8x32xf32> to vector<1x8x32xf32>
    tpu.vector_store %arg9[%72, %c0_27, %c0_28], %75 {strides = array<i32>} : memref<8x8x32xf32, #tpu.memory_space<vmem>>, vector<1x8x32xf32>,
    %c1_i32 = arith.constant 1 : i32
    %76 = vector.broadcast %0 : vector<1x32xf32> to vector<8x32xf32>
    %77 = arith.mulf %67, %76 : vector<8x32xf32>
    %78 = vector.broadcast %1 : vector<1x32xf32> to vector<8x32xf32>
    %79 = arith.mulf %65, %78 : vector<8x32xf32>
    %80 = arith.addf %77, %79 : vector<8x32xf32>
    %cst_29 = arith.constant dense<0.000000e+00> : vector<8xf32>
    %81 = vector.multi_reduction <add>, %80, %cst_29 [1] : vector<8x32xf32> to vector<8xf32>
    %82 = vector.shape_cast %81 : vector<8xf32> to vector<8x1xf32>
    %83 = vector.broadcast %82 : vector<8x1xf32> to vector<8x4xf32>
    %84 = arith.addf %83, %12 : vector<8x4xf32>
    %cst_30 = arith.constant dense<0xFF800000> : vector<8xf32>
    %85 = vector.multi_reduction <maximumf>, %84, %cst_30 [1] : vector<8x4xf32> to vector<8xf32>
    %86 = vector.shape_cast %85 : vector<8xf32> to vector<8x1xf32>
    %87 = vector.broadcast %86 : vector<8x1xf32> to vector<8x4xf32>
    %88 = arith.subf %84, %87 : vector<8x4xf32>
    %89 = math.exp %88 : vector<8x4xf32>
    %cst_31 = arith.constant dense<0.000000e+00> : vector<8xf32>
    %90 = vector.multi_reduction <add>, %89, %cst_31 [1] : vector<8x4xf32> to vector<8xf32>
    %91 = vector.shape_cast %90 : vector<8xf32> to vector<8x1xf32>
    %92 = tpu.reciprocal %91 {approx = true} : vector<8x1xf32> -> vector<8x1xf32>
    %93 = vector.broadcast %92 : vector<8x1xf32> to vector<8x4xf32>
    %94 = arith.mulf %89, %93 : vector<8x4xf32>
    %95 = arith.index_cast %c1_i32 : i32 to index
    %c0_32 = arith.constant 0 : index
    %c0_33 = arith.constant 0 : index
    %96 = vector.load %arg1[%95, %c0_32, %c0_33] : memref<8x8x4xf32, #tpu.memory_space<vmem>>, vector<1x8x4xf32>
    %97 = vector.shape_cast %96 : vector<1x8x4xf32> to vector<8x4xf32>
    %98 = arith.mulf %94, %97 : vector<8x4xf32>
    %99 = tpu.concatenate %98, %67 in 1 : vector<8x4xf32>, vector<8x32xf32> -> vector<8x36xf32>
    %100 = arith.truncf %99 : vector<8x36xf32> to vector<8x36xbf16>
    %cst_34 = arith.constant dense<0.000000e+00> : vector<8x128xf32>
    %101 = tpu.matmul %100, %2, %cst_34 {dimension_numbers = #tpu.dot_dimension_numbers<[1], [0], [0], [1], [0, 0, 1, 1], [], []>} : vector<8x36xbf16>, vector<36x128xbf16>, vector<8x128xf32> -> vector<8x128xf32>
    %102 = vector.broadcast %3 : vector<1x128xf32> to vector<8x128xf32>
    %103 = arith.addf %101, %102 : vector<8x128xf32>
    %104 = vector.extract_strided_slice %103 {offsets = [0, 0], sizes = [8, 32], strides = [1, 1]} : vector<8x128xf32> to vector<8x32xf32>
    %105 = arith.negf %104 : vector<8x32xf32>
    %106 = math.exp %105 : vector<8x32xf32>
    %cst_35 = arith.constant 1.000000e+00 : f32
    %107 = vector.broadcast %cst_35 : f32 to vector<8x32xf32>
    %108 = arith.addf %107, %106 : vector<8x32xf32>
    %109 = arith.divf %107, %108 : vector<8x32xf32>
    %110 = vector.extract_strided_slice %103 {offsets = [0, 32], sizes = [8, 32], strides = [1, 1]} : vector<8x128xf32> to vector<8x32xf32>
    %111 = arith.negf %110 : vector<8x32xf32>
    %112 = math.exp %111 : vector<8x32xf32>
    %cst_36 = arith.constant 1.000000e+00 : f32
    %113 = vector.broadcast %cst_36 : f32 to vector<8x32xf32>
    %114 = arith.addf %113, %112 : vector<8x32xf32>
    %115 = arith.divf %113, %114 : vector<8x32xf32>
    %116 = vector.extract_strided_slice %103 {offsets = [0, 64], sizes = [8, 32], strides = [1, 1]} : vector<8x128xf32> to vector<8x32xf32>
    %117 = math.tanh %116 : vector<8x32xf32>
    %118 = vector.extract_strided_slice %103 {offsets = [0, 96], sizes = [8, 32], strides = [1, 1]} : vector<8x128xf32> to vector<8x32xf32>
    %119 = arith.negf %118 : vector<8x32xf32>
    %120 = math.exp %119 : vector<8x32xf32>
    %cst_37 = arith.constant 1.000000e+00 : f32
    %121 = vector.broadcast %cst_37 : f32 to vector<8x32xf32>
    %122 = arith.addf %121, %120 : vector<8x32xf32>
    %123 = arith.divf %121, %122 : vector<8x32xf32>
    %124 = arith.mulf %115, %65 : vector<8x32xf32>
    %125 = arith.mulf %109, %117 : vector<8x32xf32>
    %126 = arith.addf %124, %125 : vector<8x32xf32>
    %127 = math.tanh %126 : vector<8x32xf32>
    %128 = arith.mulf %123, %127 : vector<8x32xf32>
    %129 = arith.index_cast %c1_i32 : i32 to index
    %c0_38 = arith.constant 0 : index
    %c0_39 = arith.constant 0 : index
    %130 = vector.load %arg8[%129, %c0_38, %c0_39] : memref<8x8x4xf32, #tpu.memory_space<vmem>>, vector<1x8x4xf32>
    %131 = vector.shape_cast %130 : vector<1x8x4xf32> to vector<8x4xf32>
    %132 = vector.shape_cast %98 : vector<8x4xf32> to vector<1x8x4xf32>
    tpu.vector_store %arg8[%129, %c0_38, %c0_39], %132 {strides = array<i32>} : memref<8x8x4xf32, #tpu.memory_space<vmem>>, vector<1x8x4xf32>,
    %133 = arith.index_cast %c1_i32 : i32 to index
    %c0_40 = arith.constant 0 : index
    %c0_41 = arith.constant 0 : index
    %134 = vector.load %arg9[%133, %c0_40, %c0_41] : memref<8x8x32xf32, #tpu.memory_space<vmem>>, vector<1x8x32xf32>
    %135 = vector.shape_cast %134 : vector<1x8x32xf32> to vector<8x32xf32>
    %136 = vector.shape_cast %128 : vector<8x32xf32> to vector<1x8x32xf32>
    tpu.vector_store %arg9[%133, %c0_40, %c0_41], %136 {strides = array<i32>} : memref<8x8x32xf32, #tpu.memory_space<vmem>>, vector<1x8x32xf32>,
    %c2_i32 = arith.constant 2 : i32
    %137 = vector.broadcast %0 : vector<1x32xf32> to vector<8x32xf32>
    %138 = arith.mulf %128, %137 : vector<8x32xf32>
    %139 = vector.broadcast %1 : vector<1x32xf32> to vector<8x32xf32>
    %140 = arith.mulf %126, %139 : vector<8x32xf32>
    %141 = arith.addf %138, %140 : vector<8x32xf32>
    %cst_42 = arith.constant dense<0.000000e+00> : vector<8xf32>
    %142 = vector.multi_reduction <add>, %141, %cst_42 [1] : vector<8x32xf32> to vector<8xf32>
    %143 = vector.shape_cast %142 : vector<8xf32> to vector<8x1xf32>
    %144 = vector.broadcast %143 : vector<8x1xf32> to vector<8x4xf32>
    %145 = arith.addf %144, %12 : vector<8x4xf32>
    %cst_43 = arith.constant dense<0xFF800000> : vector<8xf32>
    %146 = vector.multi_reduction <maximumf>, %145, %cst_43 [1] : vector<8x4xf32> to vector<8xf32>
    %147 = vector.shape_cast %146 : vector<8xf32> to vector<8x1xf32>
    %148 = vector.broadcast %147 : vector<8x1xf32> to vector<8x4xf32>
    %149 = arith.subf %145, %148 : vector<8x4xf32>
    %150 = math.exp %149 : vector<8x4xf32>
    %cst_44 = arith.constant dense<0.000000e+00> : vector<8xf32>
    %151 = vector.multi_reduction <add>, %150, %cst_44 [1] : vector<8x4xf32> to vector<8xf32>
    %152 = vector.shape_cast %151 : vector<8xf32> to vector<8x1xf32>
    %153 = tpu.reciprocal %152 {approx = true} : vector<8x1xf32> -> vector<8x1xf32>
    %154 = vector.broadcast %153 : vector<8x1xf32> to vector<8x4xf32>
    %155 = arith.mulf %150, %154 : vector<8x4xf32>
    %156 = arith.index_cast %c2_i32 : i32 to index
    %c0_45 = arith.constant 0 : index
    %c0_46 = arith.constant 0 : index
    %157 = vector.load %arg1[%156, %c0_45, %c0_46] : memref<8x8x4xf32, #tpu.memory_space<vmem>>, vector<1x8x4xf32>
    %158 = vector.shape_cast %157 : vector<1x8x4xf32> to vector<8x4xf32>
    %159 = arith.mulf %155, %158 : vector<8x4xf32>
    %160 = tpu.concatenate %159, %128 in 1 : vector<8x4xf32>, vector<8x32xf32> -> vector<8x36xf32>
    %161 = arith.truncf %160 : vector<8x36xf32> to vector<8x36xbf16>
    %cst_47 = arith.constant dense<0.000000e+00> : vector<8x128xf32>
    %162 = tpu.matmul %161, %2, %cst_47 {dimension_numbers = #tpu.dot_dimension_numbers<[1], [0], [0], [1], [0, 0, 1, 1], [], []>} : vector<8x36xbf16>, vector<36x128xbf16>, vector<8x128xf32> -> vector<8x128xf32>
    %163 = vector.broadcast %3 : vector<1x128xf32> to vector<8x128xf32>
    %164 = arith.addf %162, %163 : vector<8x128xf32>
    %165 = vector.extract_strided_slice %164 {offsets = [0, 0], sizes = [8, 32], strides = [1, 1]} : vector<8x128xf32> to vector<8x32xf32>
    %166 = arith.negf %165 : vector<8x32xf32>
    %167 = math.exp %166 : vector<8x32xf32>
    %cst_48 = arith.constant 1.000000e+00 : f32
    %168 = vector.broadcast %cst_48 : f32 to vector<8x32xf32>
    %169 = arith.addf %168, %167 : vector<8x32xf32>
    %170 = arith.divf %168, %169 : vector<8x32xf32>
    %171 = vector.extract_strided_slice %164 {offsets = [0, 32], sizes = [8, 32], strides = [1, 1]} : vector<8x128xf32> to vector<8x32xf32>
    %172 = arith.negf %171 : vector<8x32xf32>
    %173 = math.exp %172 : vector<8x32xf32>
    %cst_49 = arith.constant 1.000000e+00 : f32
    %174 = vector.broadcast %cst_49 : f32 to vector<8x32xf32>
    %175 = arith.addf %174, %173 : vector<8x32xf32>
    %176 = arith.divf %174, %175 : vector<8x32xf32>
    %177 = vector.extract_strided_slice %164 {offsets = [0, 64], sizes = [8, 32], strides = [1, 1]} : vector<8x128xf32> to vector<8x32xf32>
    %178 = math.tanh %177 : vector<8x32xf32>
    %179 = vector.extract_strided_slice %164 {offsets = [0, 96], sizes = [8, 32], strides = [1, 1]} : vector<8x128xf32> to vector<8x32xf32>
    %180 = arith.negf %179 : vector<8x32xf32>
    %181 = math.exp %180 : vector<8x32xf32>
    %cst_50 = arith.constant 1.000000e+00 : f32
    %182 = vector.broadcast %cst_50 : f32 to vector<8x32xf32>
    %183 = arith.addf %182, %181 : vector<8x32xf32>
    %184 = arith.divf %182, %183 : vector<8x32xf32>
    %185 = arith.mulf %176, %126 : vector<8x32xf32>
    %186 = arith.mulf %170, %178 : vector<8x32xf32>
    %187 = arith.addf %185, %186 : vector<8x32xf32>
    %188 = math.tanh %187 : vector<8x32xf32>
    %189 = arith.mulf %184, %188 : vector<8x32xf32>
    %190 = arith.index_cast %c2_i32 : i32 to index
    %c0_51 = arith.constant 0 : index
    %c0_52 = arith.constant 0 : index
    %191 = vector.load %arg8[%190, %c0_51, %c0_52] : memref<8x8x4xf32, #tpu.memory_space<vmem>>, vector<1x8x4xf32>
    %192 = vector.shape_cast %191 : vector<1x8x4xf32> to vector<8x4xf32>
    %193 = vector.shape_cast %159 : vector<8x4xf32> to vector<1x8x4xf32>
    tpu.vector_store %arg8[%190, %c0_51, %c0_52], %193 {strides = array<i32>} : memref<8x8x4xf32, #tpu.memory_space<vmem>>, vector<1x8x4xf32>,
    %194 = arith.index_cast %c2_i32 : i32 to index
    %c0_53 = arith.constant 0 : index
    %c0_54 = arith.constant 0 : index
    %195 = vector.load %arg9[%194, %c0_53, %c0_54] : memref<8x8x32xf32, #tpu.memory_space<vmem>>, vector<1x8x32xf32>
    %196 = vector.shape_cast %195 : vector<1x8x32xf32> to vector<8x32xf32>
    %197 = vector.shape_cast %189 : vector<8x32xf32> to vector<1x8x32xf32>
    tpu.vector_store %arg9[%194, %c0_53, %c0_54], %197 {strides = array<i32>} : memref<8x8x32xf32, #tpu.memory_space<vmem>>, vector<1x8x32xf32>,
    %c3_i32 = arith.constant 3 : i32
    %198 = vector.broadcast %0 : vector<1x32xf32> to vector<8x32xf32>
    %199 = arith.mulf %189, %198 : vector<8x32xf32>
    %200 = vector.broadcast %1 : vector<1x32xf32> to vector<8x32xf32>
    %201 = arith.mulf %187, %200 : vector<8x32xf32>
    %202 = arith.addf %199, %201 : vector<8x32xf32>
    %cst_55 = arith.constant dense<0.000000e+00> : vector<8xf32>
    %203 = vector.multi_reduction <add>, %202, %cst_55 [1] : vector<8x32xf32> to vector<8xf32>
    %204 = vector.shape_cast %203 : vector<8xf32> to vector<8x1xf32>
    %205 = vector.broadcast %204 : vector<8x1xf32> to vector<8x4xf32>
    %206 = arith.addf %205, %12 : vector<8x4xf32>
    %cst_56 = arith.constant dense<0xFF800000> : vector<8xf32>
    %207 = vector.multi_reduction <maximumf>, %206, %cst_56 [1] : vector<8x4xf32> to vector<8xf32>
    %208 = vector.shape_cast %207 : vector<8xf32> to vector<8x1xf32>
    %209 = vector.broadcast %208 : vector<8x1xf32> to vector<8x4xf32>
    %210 = arith.subf %206, %209 : vector<8x4xf32>
    %211 = math.exp %210 : vector<8x4xf32>
    %cst_57 = arith.constant dense<0.000000e+00> : vector<8xf32>
    %212 = vector.multi_reduction <add>, %211, %cst_57 [1] : vector<8x4xf32> to vector<8xf32>
    %213 = vector.shape_cast %212 : vector<8xf32> to vector<8x1xf32>
    %214 = tpu.reciprocal %213 {approx = true} : vector<8x1xf32> -> vector<8x1xf32>
    %215 = vector.broadcast %214 : vector<8x1xf32> to vector<8x4xf32>
    %216 = arith.mulf %211, %215 : vector<8x4xf32>
    %217 = arith.index_cast %c3_i32 : i32 to index
    %c0_58 = arith.constant 0 : index
    %c0_59 = arith.constant 0 : index
    %218 = vector.load %arg1[%217, %c0_58, %c0_59] : memref<8x8x4xf32, #tpu.memory_space<vmem>>, vector<1x8x4xf32>
    %219 = vector.shape_cast %218 : vector<1x8x4xf32> to vector<8x4xf32>
    %220 = arith.mulf %216, %219 : vector<8x4xf32>
    %221 = tpu.concatenate %220, %189 in 1 : vector<8x4xf32>, vector<8x32xf32> -> vector<8x36xf32>
    %222 = arith.truncf %221 : vector<8x36xf32> to vector<8x36xbf16>
    %cst_60 = arith.constant dense<0.000000e+00> : vector<8x128xf32>
    %223 = tpu.matmul %222, %2, %cst_60 {dimension_numbers = #tpu.dot_dimension_numbers<[1], [0], [0], [1], [0, 0, 1, 1], [], []>} : vector<8x36xbf16>, vector<36x128xbf16>, vector<8x128xf32> -> vector<8x128xf32>
    %224 = vector.broadcast %3 : vector<1x128xf32> to vector<8x128xf32>
    %225 = arith.addf %223, %224 : vector<8x128xf32>
    %226 = vector.extract_strided_slice %225 {offsets = [0, 0], sizes = [8, 32], strides = [1, 1]} : vector<8x128xf32> to vector<8x32xf32>
    %227 = arith.negf %226 : vector<8x32xf32>
    %228 = math.exp %227 : vector<8x32xf32>
    %cst_61 = arith.constant 1.000000e+00 : f32
    %229 = vector.broadcast %cst_61 : f32 to vector<8x32xf32>
    %230 = arith.addf %229, %228 : vector<8x32xf32>
    %231 = arith.divf %229, %230 : vector<8x32xf32>
    %232 = vector.extract_strided_slice %225 {offsets = [0, 32], sizes = [8, 32], strides = [1, 1]} : vector<8x128xf32> to vector<8x32xf32>
    %233 = arith.negf %232 : vector<8x32xf32>
    %234 = math.exp %233 : vector<8x32xf32>
    %cst_62 = arith.constant 1.000000e+00 : f32
    %235 = vector.broadcast %cst_62 : f32 to vector<8x32xf32>
    %236 = arith.addf %235, %234 : vector<8x32xf32>
    %237 = arith.divf %235, %236 : vector<8x32xf32>
    %238 = vector.extract_strided_slice %225 {offsets = [0, 64], sizes = [8, 32], strides = [1, 1]} : vector<8x128xf32> to vector<8x32xf32>
    %239 = math.tanh %238 : vector<8x32xf32>
    %240 = vector.extract_strided_slice %225 {offsets = [0, 96], sizes = [8, 32], strides = [1, 1]} : vector<8x128xf32> to vector<8x32xf32>
    %241 = arith.negf %240 : vector<8x32xf32>
    %242 = math.exp %241 : vector<8x32xf32>
    %cst_63 = arith.constant 1.000000e+00 : f32
    %243 = vector.broadcast %cst_63 : f32 to vector<8x32xf32>
    %244 = arith.addf %243, %242 : vector<8x32xf32>
    %245 = arith.divf %243, %244 : vector<8x32xf32>
    %246 = arith.mulf %237, %187 : vector<8x32xf32>
    %247 = arith.mulf %231, %239 : vector<8x32xf32>
    %248 = arith.addf %246, %247 : vector<8x32xf32>
    %249 = math.tanh %248 : vector<8x32xf32>
    %250 = arith.mulf %245, %249 : vector<8x32xf32>
    %251 = arith.index_cast %c3_i32 : i32 to index
    %c0_64 = arith.constant 0 : index
    %c0_65 = arith.constant 0 : index
    %252 = vector.load %arg8[%251, %c0_64, %c0_65] : memref<8x8x4xf32, #tpu.memory_space<vmem>>, vector<1x8x4xf32>
    %253 = vector.shape_cast %252 : vector<1x8x4xf32> to vector<8x4xf32>
    %254 = vector.shape_cast %220 : vector<8x4xf32> to vector<1x8x4xf32>
    tpu.vector_store %arg8[%251, %c0_64, %c0_65], %254 {strides = array<i32>} : memref<8x8x4xf32, #tpu.memory_space<vmem>>, vector<1x8x4xf32>,
    %255 = arith.index_cast %c3_i32 : i32 to index
    %c0_66 = arith.constant 0 : index
    %c0_67 = arith.constant 0 : index
    %256 = vector.load %arg9[%255, %c0_66, %c0_67] : memref<8x8x32xf32, #tpu.memory_space<vmem>>, vector<1x8x32xf32>
    %257 = vector.shape_cast %256 : vector<1x8x32xf32> to vector<8x32xf32>
    %258 = vector.shape_cast %250 : vector<8x32xf32> to vector<1x8x32xf32>
    tpu.vector_store %arg9[%255, %c0_66, %c0_67], %258 {strides = array<i32>} : memref<8x8x32xf32, #tpu.memory_space<vmem>>, vector<1x8x32xf32>,
    %c4_i32 = arith.constant 4 : i32
    %259 = vector.broadcast %0 : vector<1x32xf32> to vector<8x32xf32>
    %260 = arith.mulf %250, %259 : vector<8x32xf32>
    %261 = vector.broadcast %1 : vector<1x32xf32> to vector<8x32xf32>
    %262 = arith.mulf %248, %261 : vector<8x32xf32>
    %263 = arith.addf %260, %262 : vector<8x32xf32>
    %cst_68 = arith.constant dense<0.000000e+00> : vector<8xf32>
    %264 = vector.multi_reduction <add>, %263, %cst_68 [1] : vector<8x32xf32> to vector<8xf32>
    %265 = vector.shape_cast %264 : vector<8xf32> to vector<8x1xf32>
    %266 = vector.broadcast %265 : vector<8x1xf32> to vector<8x4xf32>
    %267 = arith.addf %266, %12 : vector<8x4xf32>
    %cst_69 = arith.constant dense<0xFF800000> : vector<8xf32>
    %268 = vector.multi_reduction <maximumf>, %267, %cst_69 [1] : vector<8x4xf32> to vector<8xf32>
    %269 = vector.shape_cast %268 : vector<8xf32> to vector<8x1xf32>
    %270 = vector.broadcast %269 : vector<8x1xf32> to vector<8x4xf32>
    %271 = arith.subf %267, %270 : vector<8x4xf32>
    %272 = math.exp %271 : vector<8x4xf32>
    %cst_70 = arith.constant dense<0.000000e+00> : vector<8xf32>
    %273 = vector.multi_reduction <add>, %272, %cst_70 [1] : vector<8x4xf32> to vector<8xf32>
    %274 = vector.shape_cast %273 : vector<8xf32> to vector<8x1xf32>
    %275 = tpu.reciprocal %274 {approx = true} : vector<8x1xf32> -> vector<8x1xf32>
    %276 = vector.broadcast %275 : vector<8x1xf32> to vector<8x4xf32>
    %277 = arith.mulf %272, %276 : vector<8x4xf32>
    %278 = arith.index_cast %c4_i32 : i32 to index
    %c0_71 = arith.constant 0 : index
    %c0_72 = arith.constant 0 : index
    %279 = vector.load %arg1[%278, %c0_71, %c0_72] : memref<8x8x4xf32, #tpu.memory_space<vmem>>, vector<1x8x4xf32>
    %280 = vector.shape_cast %279 : vector<1x8x4xf32> to vector<8x4xf32>
    %281 = arith.mulf %277, %280 : vector<8x4xf32>
    %282 = tpu.concatenate %281, %250 in 1 : vector<8x4xf32>, vector<8x32xf32> -> vector<8x36xf32>
    %283 = arith.truncf %282 : vector<8x36xf32> to vector<8x36xbf16>
    %cst_73 = arith.constant dense<0.000000e+00> : vector<8x128xf32>
    %284 = tpu.matmul %283, %2, %cst_73 {dimension_numbers = #tpu.dot_dimension_numbers<[1], [0], [0], [1], [0, 0, 1, 1], [], []>} : vector<8x36xbf16>, vector<36x128xbf16>, vector<8x128xf32> -> vector<8x128xf32>
    %285 = vector.broadcast %3 : vector<1x128xf32> to vector<8x128xf32>
    %286 = arith.addf %284, %285 : vector<8x128xf32>
    %287 = vector.extract_strided_slice %286 {offsets = [0, 0], sizes = [8, 32], strides = [1, 1]} : vector<8x128xf32> to vector<8x32xf32>
    %288 = arith.negf %287 : vector<8x32xf32>
    %289 = math.exp %288 : vector<8x32xf32>
    %cst_74 = arith.constant 1.000000e+00 : f32
    %290 = vector.broadcast %cst_74 : f32 to vector<8x32xf32>
    %291 = arith.addf %290, %289 : vector<8x32xf32>
    %292 = arith.divf %290, %291 : vector<8x32xf32>
    %293 = vector.extract_strided_slice %286 {offsets = [0, 32], sizes = [8, 32], strides = [1, 1]} : vector<8x128xf32> to vector<8x32xf32>
    %294 = arith.negf %293 : vector<8x32xf32>
    %295 = math.exp %294 : vector<8x32xf32>
    %cst_75 = arith.constant 1.000000e+00 : f32
    %296 = vector.broadcast %cst_75 : f32 to vector<8x32xf32>
    %297 = arith.addf %296, %295 : vector<8x32xf32>
    %298 = arith.divf %296, %297 : vector<8x32xf32>
    %299 = vector.extract_strided_slice %286 {offsets = [0, 64], sizes = [8, 32], strides = [1, 1]} : vector<8x128xf32> to vector<8x32xf32>
    %300 = math.tanh %299 : vector<8x32xf32>
    %301 = vector.extract_strided_slice %286 {offsets = [0, 96], sizes = [8, 32], strides = [1, 1]} : vector<8x128xf32> to vector<8x32xf32>
    %302 = arith.negf %301 : vector<8x32xf32>
    %303 = math.exp %302 : vector<8x32xf32>
    %cst_76 = arith.constant 1.000000e+00 : f32
    %304 = vector.broadcast %cst_76 : f32 to vector<8x32xf32>
    %305 = arith.addf %304, %303 : vector<8x32xf32>
    %306 = arith.divf %304, %305 : vector<8x32xf32>
    %307 = arith.mulf %298, %248 : vector<8x32xf32>
    %308 = arith.mulf %292, %300 : vector<8x32xf32>
    %309 = arith.addf %307, %308 : vector<8x32xf32>
    %310 = math.tanh %309 : vector<8x32xf32>
    %311 = arith.mulf %306, %310 : vector<8x32xf32>
    %312 = arith.index_cast %c4_i32 : i32 to index
    %c0_77 = arith.constant 0 : index
    %c0_78 = arith.constant 0 : index
    %313 = vector.load %arg8[%312, %c0_77, %c0_78] : memref<8x8x4xf32, #tpu.memory_space<vmem>>, vector<1x8x4xf32>
    %314 = vector.shape_cast %313 : vector<1x8x4xf32> to vector<8x4xf32>
    %315 = vector.shape_cast %281 : vector<8x4xf32> to vector<1x8x4xf32>
    tpu.vector_store %arg8[%312, %c0_77, %c0_78], %315 {strides = array<i32>} : memref<8x8x4xf32, #tpu.memory_space<vmem>>, vector<1x8x4xf32>,
    %316 = arith.index_cast %c4_i32 : i32 to index
    %c0_79 = arith.constant 0 : index
    %c0_80 = arith.constant 0 : index
    %317 = vector.load %arg9[%316, %c0_79, %c0_80] : memref<8x8x32xf32, #tpu.memory_space<vmem>>, vector<1x8x32xf32>
    %318 = vector.shape_cast %317 : vector<1x8x32xf32> to vector<8x32xf32>
    %319 = vector.shape_cast %311 : vector<8x32xf32> to vector<1x8x32xf32>
    tpu.vector_store %arg9[%316, %c0_79, %c0_80], %319 {strides = array<i32>} : memref<8x8x32xf32, #tpu.memory_space<vmem>>, vector<1x8x32xf32>,
    %c5_i32 = arith.constant 5 : i32
    %320 = vector.broadcast %0 : vector<1x32xf32> to vector<8x32xf32>
    %321 = arith.mulf %311, %320 : vector<8x32xf32>
    %322 = vector.broadcast %1 : vector<1x32xf32> to vector<8x32xf32>
    %323 = arith.mulf %309, %322 : vector<8x32xf32>
    %324 = arith.addf %321, %323 : vector<8x32xf32>
    %cst_81 = arith.constant dense<0.000000e+00> : vector<8xf32>
    %325 = vector.multi_reduction <add>, %324, %cst_81 [1] : vector<8x32xf32> to vector<8xf32>
    %326 = vector.shape_cast %325 : vector<8xf32> to vector<8x1xf32>
    %327 = vector.broadcast %326 : vector<8x1xf32> to vector<8x4xf32>
    %328 = arith.addf %327, %12 : vector<8x4xf32>
    %cst_82 = arith.constant dense<0xFF800000> : vector<8xf32>
    %329 = vector.multi_reduction <maximumf>, %328, %cst_82 [1] : vector<8x4xf32> to vector<8xf32>
    %330 = vector.shape_cast %329 : vector<8xf32> to vector<8x1xf32>
    %331 = vector.broadcast %330 : vector<8x1xf32> to vector<8x4xf32>
    %332 = arith.subf %328, %331 : vector<8x4xf32>
    %333 = math.exp %332 : vector<8x4xf32>
    %cst_83 = arith.constant dense<0.000000e+00> : vector<8xf32>
    %334 = vector.multi_reduction <add>, %333, %cst_83 [1] : vector<8x4xf32> to vector<8xf32>
    %335 = vector.shape_cast %334 : vector<8xf32> to vector<8x1xf32>
    %336 = tpu.reciprocal %335 {approx = true} : vector<8x1xf32> -> vector<8x1xf32>
    %337 = vector.broadcast %336 : vector<8x1xf32> to vector<8x4xf32>
    %338 = arith.mulf %333, %337 : vector<8x4xf32>
    %339 = arith.index_cast %c5_i32 : i32 to index
    %c0_84 = arith.constant 0 : index
    %c0_85 = arith.constant 0 : index
    %340 = vector.load %arg1[%339, %c0_84, %c0_85] : memref<8x8x4xf32, #tpu.memory_space<vmem>>, vector<1x8x4xf32>
    %341 = vector.shape_cast %340 : vector<1x8x4xf32> to vector<8x4xf32>
    %342 = arith.mulf %338, %341 : vector<8x4xf32>
    %343 = tpu.concatenate %342, %311 in 1 : vector<8x4xf32>, vector<8x32xf32> -> vector<8x36xf32>
    %344 = arith.truncf %343 : vector<8x36xf32> to vector<8x36xbf16>
    %cst_86 = arith.constant dense<0.000000e+00> : vector<8x128xf32>
    %345 = tpu.matmul %344, %2, %cst_86 {dimension_numbers = #tpu.dot_dimension_numbers<[1], [0], [0], [1], [0, 0, 1, 1], [], []>} : vector<8x36xbf16>, vector<36x128xbf16>, vector<8x128xf32> -> vector<8x128xf32>
    %346 = vector.broadcast %3 : vector<1x128xf32> to vector<8x128xf32>
    %347 = arith.addf %345, %346 : vector<8x128xf32>
    %348 = vector.extract_strided_slice %347 {offsets = [0, 0], sizes = [8, 32], strides = [1, 1]} : vector<8x128xf32> to vector<8x32xf32>
    %349 = arith.negf %348 : vector<8x32xf32>
    %350 = math.exp %349 : vector<8x32xf32>
    %cst_87 = arith.constant 1.000000e+00 : f32
    %351 = vector.broadcast %cst_87 : f32 to vector<8x32xf32>
    %352 = arith.addf %351, %350 : vector<8x32xf32>
    %353 = arith.divf %351, %352 : vector<8x32xf32>
    %354 = vector.extract_strided_slice %347 {offsets = [0, 32], sizes = [8, 32], strides = [1, 1]} : vector<8x128xf32> to vector<8x32xf32>
    %355 = arith.negf %354 : vector<8x32xf32>
    %356 = math.exp %355 : vector<8x32xf32>
    %cst_88 = arith.constant 1.000000e+00 : f32
    %357 = vector.broadcast %cst_88 : f32 to vector<8x32xf32>
    %358 = arith.addf %357, %356 : vector<8x32xf32>
    %359 = arith.divf %357, %358 : vector<8x32xf32>
    %360 = vector.extract_strided_slice %347 {offsets = [0, 64], sizes = [8, 32], strides = [1, 1]} : vector<8x128xf32> to vector<8x32xf32>
    %361 = math.tanh %360 : vector<8x32xf32>
    %362 = vector.extract_strided_slice %347 {offsets = [0, 96], sizes = [8, 32], strides = [1, 1]} : vector<8x128xf32> to vector<8x32xf32>
    %363 = arith.negf %362 : vector<8x32xf32>
    %364 = math.exp %363 : vector<8x32xf32>
    %cst_89 = arith.constant 1.000000e+00 : f32
    %365 = vector.broadcast %cst_89 : f32 to vector<8x32xf32>
    %366 = arith.addf %365, %364 : vector<8x32xf32>
    %367 = arith.divf %365, %366 : vector<8x32xf32>
    %368 = arith.mulf %359, %309 : vector<8x32xf32>
    %369 = arith.mulf %353, %361 : vector<8x32xf32>
    %370 = arith.addf %368, %369 : vector<8x32xf32>
    %371 = math.tanh %370 : vector<8x32xf32>
    %372 = arith.mulf %367, %371 : vector<8x32xf32>
    %373 = arith.index_cast %c5_i32 : i32 to index
    %c0_90 = arith.constant 0 : index
    %c0_91 = arith.constant 0 : index
    %374 = vector.load %arg8[%373, %c0_90, %c0_91] : memref<8x8x4xf32, #tpu.memory_space<vmem>>, vector<1x8x4xf32>
    %375 = vector.shape_cast %374 : vector<1x8x4xf32> to vector<8x4xf32>
    %376 = vector.shape_cast %342 : vector<8x4xf32> to vector<1x8x4xf32>
    tpu.vector_store %arg8[%373, %c0_90, %c0_91], %376 {strides = array<i32>} : memref<8x8x4xf32, #tpu.memory_space<vmem>>, vector<1x8x4xf32>,
    %377 = arith.index_cast %c5_i32 : i32 to index
    %c0_92 = arith.constant 0 : index
    %c0_93 = arith.constant 0 : index
    %378 = vector.load %arg9[%377, %c0_92, %c0_93] : memref<8x8x32xf32, #tpu.memory_space<vmem>>, vector<1x8x32xf32>
    %379 = vector.shape_cast %378 : vector<1x8x32xf32> to vector<8x32xf32>
    %380 = vector.shape_cast %372 : vector<8x32xf32> to vector<1x8x32xf32>
    tpu.vector_store %arg9[%377, %c0_92, %c0_93], %380 {strides = array<i32>} : memref<8x8x32xf32, #tpu.memory_space<vmem>>, vector<1x8x32xf32>,
    %c6_i32 = arith.constant 6 : i32
    %381 = vector.broadcast %0 : vector<1x32xf32> to vector<8x32xf32>
    %382 = arith.mulf %372, %381 : vector<8x32xf32>
    %383 = vector.broadcast %1 : vector<1x32xf32> to vector<8x32xf32>
    %384 = arith.mulf %370, %383 : vector<8x32xf32>
    %385 = arith.addf %382, %384 : vector<8x32xf32>
    %cst_94 = arith.constant dense<0.000000e+00> : vector<8xf32>
    %386 = vector.multi_reduction <add>, %385, %cst_94 [1] : vector<8x32xf32> to vector<8xf32>
    %387 = vector.shape_cast %386 : vector<8xf32> to vector<8x1xf32>
    %388 = vector.broadcast %387 : vector<8x1xf32> to vector<8x4xf32>
    %389 = arith.addf %388, %12 : vector<8x4xf32>
    %cst_95 = arith.constant dense<0xFF800000> : vector<8xf32>
    %390 = vector.multi_reduction <maximumf>, %389, %cst_95 [1] : vector<8x4xf32> to vector<8xf32>
    %391 = vector.shape_cast %390 : vector<8xf32> to vector<8x1xf32>
    %392 = vector.broadcast %391 : vector<8x1xf32> to vector<8x4xf32>
    %393 = arith.subf %389, %392 : vector<8x4xf32>
    %394 = math.exp %393 : vector<8x4xf32>
    %cst_96 = arith.constant dense<0.000000e+00> : vector<8xf32>
    %395 = vector.multi_reduction <add>, %394, %cst_96 [1] : vector<8x4xf32> to vector<8xf32>
    %396 = vector.shape_cast %395 : vector<8xf32> to vector<8x1xf32>
    %397 = tpu.reciprocal %396 {approx = true} : vector<8x1xf32> -> vector<8x1xf32>
    %398 = vector.broadcast %397 : vector<8x1xf32> to vector<8x4xf32>
    %399 = arith.mulf %394, %398 : vector<8x4xf32>
    %400 = arith.index_cast %c6_i32 : i32 to index
    %c0_97 = arith.constant 0 : index
    %c0_98 = arith.constant 0 : index
    %401 = vector.load %arg1[%400, %c0_97, %c0_98] : memref<8x8x4xf32, #tpu.memory_space<vmem>>, vector<1x8x4xf32>
    %402 = vector.shape_cast %401 : vector<1x8x4xf32> to vector<8x4xf32>
    %403 = arith.mulf %399, %402 : vector<8x4xf32>
    %404 = tpu.concatenate %403, %372 in 1 : vector<8x4xf32>, vector<8x32xf32> -> vector<8x36xf32>
    %405 = arith.truncf %404 : vector<8x36xf32> to vector<8x36xbf16>
    %cst_99 = arith.constant dense<0.000000e+00> : vector<8x128xf32>
    %406 = tpu.matmul %405, %2, %cst_99 {dimension_numbers = #tpu.dot_dimension_numbers<[1], [0], [0], [1], [0, 0, 1, 1], [], []>} : vector<8x36xbf16>, vector<36x128xbf16>, vector<8x128xf32> -> vector<8x128xf32>
    %407 = vector.broadcast %3 : vector<1x128xf32> to vector<8x128xf32>
    %408 = arith.addf %406, %407 : vector<8x128xf32>
    %409 = vector.extract_strided_slice %408 {offsets = [0, 0], sizes = [8, 32], strides = [1, 1]} : vector<8x128xf32> to vector<8x32xf32>
    %410 = arith.negf %409 : vector<8x32xf32>
    %411 = math.exp %410 : vector<8x32xf32>
    %cst_100 = arith.constant 1.000000e+00 : f32
    %412 = vector.broadcast %cst_100 : f32 to vector<8x32xf32>
    %413 = arith.addf %412, %411 : vector<8x32xf32>
    %414 = arith.divf %412, %413 : vector<8x32xf32>
    %415 = vector.extract_strided_slice %408 {offsets = [0, 32], sizes = [8, 32], strides = [1, 1]} : vector<8x128xf32> to vector<8x32xf32>
    %416 = arith.negf %415 : vector<8x32xf32>
    %417 = math.exp %416 : vector<8x32xf32>
    %cst_101 = arith.constant 1.000000e+00 : f32
    %418 = vector.broadcast %cst_101 : f32 to vector<8x32xf32>
    %419 = arith.addf %418, %417 : vector<8x32xf32>
    %420 = arith.divf %418, %419 : vector<8x32xf32>
    %421 = vector.extract_strided_slice %408 {offsets = [0, 64], sizes = [8, 32], strides = [1, 1]} : vector<8x128xf32> to vector<8x32xf32>
    %422 = math.tanh %421 : vector<8x32xf32>
    %423 = vector.extract_strided_slice %408 {offsets = [0, 96], sizes = [8, 32], strides = [1, 1]} : vector<8x128xf32> to vector<8x32xf32>
    %424 = arith.negf %423 : vector<8x32xf32>
    %425 = math.exp %424 : vector<8x32xf32>
    %cst_102 = arith.constant 1.000000e+00 : f32
    %426 = vector.broadcast %cst_102 : f32 to vector<8x32xf32>
    %427 = arith.addf %426, %425 : vector<8x32xf32>
    %428 = arith.divf %426, %427 : vector<8x32xf32>
    %429 = arith.mulf %420, %370 : vector<8x32xf32>
    %430 = arith.mulf %414, %422 : vector<8x32xf32>
    %431 = arith.addf %429, %430 : vector<8x32xf32>
    %432 = math.tanh %431 : vector<8x32xf32>
    %433 = arith.mulf %428, %432 : vector<8x32xf32>
    %434 = arith.index_cast %c6_i32 : i32 to index
    %c0_103 = arith.constant 0 : index
    %c0_104 = arith.constant 0 : index
    %435 = vector.load %arg8[%434, %c0_103, %c0_104] : memref<8x8x4xf32, #tpu.memory_space<vmem>>, vector<1x8x4xf32>
    %436 = vector.shape_cast %435 : vector<1x8x4xf32> to vector<8x4xf32>
    %437 = vector.shape_cast %403 : vector<8x4xf32> to vector<1x8x4xf32>
    tpu.vector_store %arg8[%434, %c0_103, %c0_104], %437 {strides = array<i32>} : memref<8x8x4xf32, #tpu.memory_space<vmem>>, vector<1x8x4xf32>,
    %438 = arith.index_cast %c6_i32 : i32 to index
    %c0_105 = arith.constant 0 : index
    %c0_106 = arith.constant 0 : index
    %439 = vector.load %arg9[%438, %c0_105, %c0_106] : memref<8x8x32xf32, #tpu.memory_space<vmem>>, vector<1x8x32xf32>
    %440 = vector.shape_cast %439 : vector<1x8x32xf32> to vector<8x32xf32>
    %441 = vector.shape_cast %433 : vector<8x32xf32> to vector<1x8x32xf32>
    tpu.vector_store %arg9[%438, %c0_105, %c0_106], %441 {strides = array<i32>} : memref<8x8x32xf32, #tpu.memory_space<vmem>>, vector<1x8x32xf32>,
    %c7_i32 = arith.constant 7 : i32
    %442 = vector.broadcast %0 : vector<1x32xf32> to vector<8x32xf32>
    %443 = arith.mulf %433, %442 : vector<8x32xf32>
    %444 = vector.broadcast %1 : vector<1x32xf32> to vector<8x32xf32>
    %445 = arith.mulf %431, %444 : vector<8x32xf32>
    %446 = arith.addf %443, %445 : vector<8x32xf32>
    %cst_107 = arith.constant dense<0.000000e+00> : vector<8xf32>
    %447 = vector.multi_reduction <add>, %446, %cst_107 [1] : vector<8x32xf32> to vector<8xf32>
    %448 = vector.shape_cast %447 : vector<8xf32> to vector<8x1xf32>
    %449 = vector.broadcast %448 : vector<8x1xf32> to vector<8x4xf32>
    %450 = arith.addf %449, %12 : vector<8x4xf32>
    %cst_108 = arith.constant dense<0xFF800000> : vector<8xf32>
    %451 = vector.multi_reduction <maximumf>, %450, %cst_108 [1] : vector<8x4xf32> to vector<8xf32>
    %452 = vector.shape_cast %451 : vector<8xf32> to vector<8x1xf32>
    %453 = vector.broadcast %452 : vector<8x1xf32> to vector<8x4xf32>
    %454 = arith.subf %450, %453 : vector<8x4xf32>
    %455 = math.exp %454 : vector<8x4xf32>
    %cst_109 = arith.constant dense<0.000000e+00> : vector<8xf32>
    %456 = vector.multi_reduction <add>, %455, %cst_109 [1] : vector<8x4xf32> to vector<8xf32>
    %457 = vector.shape_cast %456 : vector<8xf32> to vector<8x1xf32>
    %458 = tpu.reciprocal %457 {approx = true} : vector<8x1xf32> -> vector<8x1xf32>
    %459 = vector.broadcast %458 : vector<8x1xf32> to vector<8x4xf32>
    %460 = arith.mulf %455, %459 : vector<8x4xf32>
    %461 = arith.index_cast %c7_i32 : i32 to index
    %c0_110 = arith.constant 0 : index
    %c0_111 = arith.constant 0 : index
    %462 = vector.load %arg1[%461, %c0_110, %c0_111] : memref<8x8x4xf32, #tpu.memory_space<vmem>>, vector<1x8x4xf32>
    %463 = vector.shape_cast %462 : vector<1x8x4xf32> to vector<8x4xf32>
    %464 = arith.mulf %460, %463 : vector<8x4xf32>
    %465 = tpu.concatenate %464, %433 in 1 : vector<8x4xf32>, vector<8x32xf32> -> vector<8x36xf32>
    %466 = arith.truncf %465 : vector<8x36xf32> to vector<8x36xbf16>
    %cst_112 = arith.constant dense<0.000000e+00> : vector<8x128xf32>
    %467 = tpu.matmul %466, %2, %cst_112 {dimension_numbers = #tpu.dot_dimension_numbers<[1], [0], [0], [1], [0, 0, 1, 1], [], []>} : vector<8x36xbf16>, vector<36x128xbf16>, vector<8x128xf32> -> vector<8x128xf32>
    %468 = vector.broadcast %3 : vector<1x128xf32> to vector<8x128xf32>
    %469 = arith.addf %467, %468 : vector<8x128xf32>
    %470 = vector.extract_strided_slice %469 {offsets = [0, 0], sizes = [8, 32], strides = [1, 1]} : vector<8x128xf32> to vector<8x32xf32>
    %471 = arith.negf %470 : vector<8x32xf32>
    %472 = math.exp %471 : vector<8x32xf32>
    %cst_113 = arith.constant 1.000000e+00 : f32
    %473 = vector.broadcast %cst_113 : f32 to vector<8x32xf32>
    %474 = arith.addf %473, %472 : vector<8x32xf32>
    %475 = arith.divf %473, %474 : vector<8x32xf32>
    %476 = vector.extract_strided_slice %469 {offsets = [0, 32], sizes = [8, 32], strides = [1, 1]} : vector<8x128xf32> to vector<8x32xf32>
    %477 = arith.negf %476 : vector<8x32xf32>
    %478 = math.exp %477 : vector<8x32xf32>
    %cst_114 = arith.constant 1.000000e+00 : f32
    %479 = vector.broadcast %cst_114 : f32 to vector<8x32xf32>
    %480 = arith.addf %479, %478 : vector<8x32xf32>
    %481 = arith.divf %479, %480 : vector<8x32xf32>
    %482 = vector.extract_strided_slice %469 {offsets = [0, 64], sizes = [8, 32], strides = [1, 1]} : vector<8x128xf32> to vector<8x32xf32>
    %483 = math.tanh %482 : vector<8x32xf32>
    %484 = vector.extract_strided_slice %469 {offsets = [0, 96], sizes = [8, 32], strides = [1, 1]} : vector<8x128xf32> to vector<8x32xf32>
    %485 = arith.negf %484 : vector<8x32xf32>
    %486 = math.exp %485 : vector<8x32xf32>
    %cst_115 = arith.constant 1.000000e+00 : f32
    %487 = vector.broadcast %cst_115 : f32 to vector<8x32xf32>
    %488 = arith.addf %487, %486 : vector<8x32xf32>
    %489 = arith.divf %487, %488 : vector<8x32xf32>
    %490 = arith.mulf %481, %431 : vector<8x32xf32>
    %491 = arith.mulf %475, %483 : vector<8x32xf32>
    %492 = arith.addf %490, %491 : vector<8x32xf32>
    %493 = math.tanh %492 : vector<8x32xf32>
    %494 = arith.mulf %489, %493 : vector<8x32xf32>
    %495 = arith.index_cast %c7_i32 : i32 to index
    %c0_116 = arith.constant 0 : index
    %c0_117 = arith.constant 0 : index
    %496 = vector.load %arg8[%495, %c0_116, %c0_117] : memref<8x8x4xf32, #tpu.memory_space<vmem>>, vector<1x8x4xf32>
    %497 = vector.shape_cast %496 : vector<1x8x4xf32> to vector<8x4xf32>
    %498 = vector.shape_cast %464 : vector<8x4xf32> to vector<1x8x4xf32>
    tpu.vector_store %arg8[%495, %c0_116, %c0_117], %498 {strides = array<i32>} : memref<8x8x4xf32, #tpu.memory_space<vmem>>, vector<1x8x4xf32>,
    %499 = arith.index_cast %c7_i32 : i32 to index
    %c0_118 = arith.constant 0 : index
    %c0_119 = arith.constant 0 : index
    %500 = vector.load %arg9[%499, %c0_118, %c0_119] : memref<8x8x32xf32, #tpu.memory_space<vmem>>, vector<1x8x32xf32>
    %501 = vector.shape_cast %500 : vector<1x8x32xf32> to vector<8x32xf32>
    %502 = vector.shape_cast %494 : vector<8x32xf32> to vector<1x8x32xf32>
    tpu.vector_store %arg9[%499, %c0_118, %c0_119], %502 {strides = array<i32>} : memref<8x8x32xf32, #tpu.memory_space<vmem>>, vector<1x8x32xf32>,
    %c8_i32 = arith.constant 8 : i32
    return
  }
  func.func @transform_0(%arg0: i32) -> (i32, i32, i32) {
    %c0_i32 = arith.constant 0 : i32
    %c0_i32_0 = arith.constant 0 : i32
    %c0_i32_1 = arith.constant 0 : i32
    return %c0_i32, %arg0, %c0_i32_0 : i32, i32, i32
  }
  func.func @transform_1(%arg0: i32) -> (i32, i32) {
    %c0_i32 = arith.constant 0 : i32
    %c0_i32_0 = arith.constant 0 : i32
    %c0_i32_1 = arith.constant 0 : i32
    return %c0_i32, %c0_i32_0 : i32, i32
  }
  func.func @transform_2(%arg0: i32) -> (i32, i32) {
    %c0_i32 = arith.constant 0 : i32
    %c0_i32_0 = arith.constant 0 : i32
    %c0_i32_1 = arith.constant 0 : i32
    return %c0_i32, %c0_i32_0 : i32, i32
  }
  func.func @transform_3(%arg0: i32) -> (i32, i32) {
    %c0_i32 = arith.constant 0 : i32
    %c0_i32_0 = arith.constant 0 : i32
    %c0_i32_1 = arith.constant 0 : i32
    return %c0_i32, %c0_i32_0 : i32, i32
  }
  func.func @transform_4(%arg0: i32) -> (i32, i32) {
    %c0_i32 = arith.constant 0 : i32
    %c0_i32_0 = arith.constant 0 : i32
    %c0_i32_1 = arith.constant 0 : i32
    return %c0_i32, %c0_i32_0 : i32, i32
  }
  func.func @transform_5(%arg0: i32) -> (i32, i32) {
    %c0_i32 = arith.constant 0 : i32
    %c0_i32_0 = arith.constant 0 : i32
    %c0_i32_1 = arith.constant 0 : i32
    return %c0_i32, %c0_i32_0 : i32, i32
  }
  func.func @transform_6(%arg0: i32) -> (i32, i32) {
    %c0_i32 = arith.constant 0 : i32
    %c0_i32_0 = arith.constant 0 : i32
    %c0_i32_1 = arith.constant 0 : i32
    return %c0_i32, %c0_i32_0 : i32, i32
  }
  func.func @transform_7(%arg0: i32) -> (i32, i32, i32) {
    %c0_i32 = arith.constant 0 : i32
    %c0_i32_0 = arith.constant 0 : i32
    %c0_i32_1 = arith.constant 0 : i32
    return %c0_i32, %arg0, %c0_i32_0 : i32, i32, i32
  }
  func.func @transform_8(%arg0: i32) -> (i32, i32, i32) {
    %c0_i32 = arith.constant 0 : i32
    %c0_i32_0 = arith.constant 0 : i32
    %c0_i32_1 = arith.constant 0 : i32
    return %c0_i32, %arg0, %c0_i32_0 : i32, i32, i32
  }
}

</mosaic_0001>

<llo_original>
// kernel: tpu_custom_call.1
$region0: #{tpu_custom_call.1}
  #allocation0 [shape = 'u32[]', space=smem, size = 0x4, offset = 0x4, fixed_abs, tag = 'smem constant byte address 0x4 - core index']
  #allocation1 [shape = 'u32[72,128]{1,0:T(1,128)}', space=vmem, size = 0x9000, scoped, tag = 'internal scratch']
  #allocation2 [shape = 'f32[1,1]{1,0:T(1,128)S(1)}', space=vmem, size = 0x200, scoped, tag = 'scoped memory for tpu_custom_call.1']
  %s0 = inlined_call_operand.vmem [shape: f32[8,8,4], index: 0, kind: input, shape index: {}]
  %s1 = inlined_call_operand.vmem [shape: f32[8,1], index: 1, kind: input, shape index: {}]
  %s2 = inlined_call_operand.<no memory space> [shape: f32[1,1], index: 2, kind: input, shape index: {}]
  %s3 = inlined_call_operand.vmem [shape: f32[1,32], index: 3, kind: input, shape index: {}]
  %s4 = inlined_call_operand.vmem [shape: f32[1,32], index: 4, kind: input, shape index: {}]
  %s5 = inlined_call_operand.vmem [shape: bf16[36,128], index: 5, kind: input, shape index: {}]
  %s6 = inlined_call_operand.vmem [shape: f32[1,128], index: 6, kind: input, shape index: {}]
  %s7 = inlined_call_operand.vmem [shape: f32[8,8,4], index: 7, kind: output, shape index: {0}]
  %s8 = inlined_call_operand.hbm [shape: f32[8,8,32], index: 8, kind: output, shape index: {1}]
  %9 = xla_tuple %s7, %s8
  %s10 = sld [smem:[#allocation0]]
  $region46: #{tpu_custom_call.1} parent=0
    _
  %s12 = ssub.s32 1, %s10
  %s13 = scalar_select 0, %s12, %s10
  %v14 = vstv %s2
  %15 = vst [vmem:[#allocation2] sm:$0x1] %v14
  $region1: #{tpu_custom_call.1} parent=0
    #allocation3 [shape = 'u8[32768]{0}', space=vmem, size = 0x8000, scoped, tag = 'output window, operand 1, single buffered']
    #allocation4 [shape = 's32[1]{0}', space=sflag, size = 0x4, scoped, tag = 'scoped memory for tpu_custom_call.1']
    %16 = vsyncpa [#allocation4], 0
    // Predicated region
    $region2: #{tpu_custom_call.1} parent=1 // pred_check
      _
    $region3: #{tpu_custom_call.1} parent=1 // pred_check_branch
      %18 = sbr.rel (0) target = $region5
    $region4: #{tpu_custom_call.1} parent=1 // pred_region
      _
    $region5: #{tpu_custom_call.1} parent=1 // pred_fallthru
      _
    // Predicated region
    $region6: #{tpu_custom_call.1} parent=1 // pred_check
      _
    $region7: #{tpu_custom_call.1} parent=1 // pred_check_branch
      %20 = sbr.rel (0) target = $region9
    $region8: #{tpu_custom_call.1} parent=1 // pred_region
      _
    $region9: #{tpu_custom_call.1} parent=1 // pred_fallthru
      _
    // Predicated region
    $region10: #{tpu_custom_call.1} parent=1 // pred_check
      _
    $region11: #{tpu_custom_call.1} parent=1 // pred_check_branch
      %22 = sbr.rel (0) target = $region13
    $region12: #{tpu_custom_call.1} parent=1 // pred_region
      _
    $region13: #{tpu_custom_call.1} parent=1 // pred_fallthru
      _
    // Predicated region
    $region14: #{tpu_custom_call.1} parent=1 // pred_check
      _
    $region15: #{tpu_custom_call.1} parent=1 // pred_check_branch
      %24 = sbr.rel (0) target = $region17
    $region16: #{tpu_custom_call.1} parent=1 // pred_region
      _
    $region17: #{tpu_custom_call.1} parent=1 // pred_fallthru
      _
    // Predicated region
    $region18: #{tpu_custom_call.1} parent=1 // pred_check
      _
    $region19: #{tpu_custom_call.1} parent=1 // pred_check_branch
      %26 = sbr.rel (0) target = $region21
    $region20: #{tpu_custom_call.1} parent=1 // pred_region
      _
    $region21: #{tpu_custom_call.1} parent=1 // pred_fallthru
      _
    // Predicated region
    $region22: #{tpu_custom_call.1} parent=1 // pred_check
      _
    $region23: #{tpu_custom_call.1} parent=1 // pred_check_branch
      %28 = sbr.rel (0) target = $region25
    $region24: #{tpu_custom_call.1} parent=1 // pred_region
      _
    $region25: #{tpu_custom_call.1} parent=1 // pred_fallthru
      _
    // Predicated region
    $region26: #{tpu_custom_call.1} parent=1 // pred_check
      _
    $region27: #{tpu_custom_call.1} parent=1 // pred_check_branch
      %30 = sbr.rel (0) target = $region29
    $region28: #{tpu_custom_call.1} parent=1 // pred_region
      _
    $region29: #{tpu_custom_call.1} parent=1 // pred_fallthru
      _
    %v32 = vld [vmem:[%s3] sm:$0x1]
    %v33 = vld [vmem:[%s4] sm:$0x1]
    %v34 = vld [vmem:[%s5] sm:$0xf]
    %v35 = vld [vmem:[%s5 + $0x4] sm:$0xf]
    %v36 = vld [vmem:[%s5 + $0x8] sm:$0xf]
    %v37 = vld [vmem:[%s5 + $0xc] sm:$0xf]
    %v38 = vld [vmem:[%s5 + $0x10] sm:$0x3]
    %v39 = vld [vmem:[%s6] sm:$0x1]
    %v40 = vld [vmem:[%s0] sm:$0xff]
    %v41 = vld [vmem:[%s0 + $0x8] sm:$0xff]
    %v42 = vld [vmem:[%s0 + $0x10] sm:$0xff]
    %v43 = vld [vmem:[%s0 + $0x18] sm:$0xff]
    %v44 = vld [vmem:[%s0 + $0x20] sm:$0xff]
    %v45 = vld [vmem:[%s0 + $0x28] sm:$0xff]
    %v46 = vld [vmem:[%s0 + $0x30] sm:$0xff]
    %v47 = vld [vmem:[%s0 + $0x38] sm:$0xff]
    %v48 = vld [vmem:[%s1] sm:$0xff]
    %v50 = vrot.slane %v48, 1
    %v51 = vrot.slane %v48, 2
    %v52 = vrot.slane %v48, 3
    %v53 = vrot.slane %v48, 4
    %v54 = vrot.slane %v48, 5
    %v55 = vrot.slane %v48, 6
    %v56 = vrot.slane %v48, 7
    %v57 = vperm.slane %v48, 0
    %v58 = vperm.slane %v50, 0
    %v59 = vperm.slane %v51, 0
    %v60 = vperm.slane %v52, 0
    %v61 = vperm.slane %v53, 0
    %v62 = vperm.slane %v54, 0
    %v63 = vperm.slane %v55, 0
    %v64 = vperm.slane %v56, 0
    %65 = vset.pattern.permute.xlu0 0
    %66 = vperm.xlu0 %65, %v57
    %v67 = vpop.permute.xlu0 %66
    %69 = vset.pattern.permute.xlu0 0
    %70 = vperm.xlu0 %69, %v58
    %v71 = vpop.permute.xlu0 %70
    %73 = vset.pattern.permute.xlu0 0
    %74 = vperm.xlu0 %73, %v59
    %v75 = vpop.permute.xlu0 %74
    %77 = vset.pattern.permute.xlu0 0
    %78 = vperm.xlu0 %77, %v60
    %v79 = vpop.permute.xlu0 %78
    %81 = vset.pattern.permute.xlu0 0
    %82 = vperm.xlu0 %81, %v61
    %v83 = vpop.permute.xlu0 %82
    %85 = vset.pattern.permute.xlu0 0
    %86 = vperm.xlu0 %85, %v62
    %v87 = vpop.permute.xlu0 %86
    %89 = vset.pattern.permute.xlu0 0
    %90 = vperm.xlu0 %89, %v63
    %v91 = vpop.permute.xlu0 %90
    %93 = vset.pattern.permute.xlu0 0
    %94 = vperm.xlu0 %93, %v64
    %v95 = vpop.permute.xlu0 %94
    %v97 = vmul.f32 %v40, %v67
    %v98 = vmul.f32 %v41, %v71
    %v99 = vmul.f32 %v42, %v75
    %v100 = vmul.f32 %v43, %v79
    %v101 = vmul.f32 %v44, %v83
    %v102 = vmul.f32 %v45, %v87
    %v103 = vmul.f32 %v46, %v91
    %v104 = vmul.f32 %v47, %v95
    %vm105 = vcmask 31744
    %v106 = vsel %vm105, %v97, 0.0
    %v107 = vsel %vm105, %v98, 0.0
    %v108 = vadd.f32 %v106, %v107
    %v109 = vsel %vm105, %v99, 0.0
    %v110 = vadd.f32 %v108, %v109
    %v111 = vsel %vm105, %v100, 0.0
    %v112 = vadd.f32 %v110, %v111
    %v113 = vsel %vm105, %v101, 0.0
    %v114 = vadd.f32 %v112, %v113
    %v115 = vsel %vm105, %v102, 0.0
    %v116 = vadd.f32 %v114, %v115
    %v117 = vsel %vm105, %v103, 0.0
    %v118 = vadd.f32 %v116, %v117
    %v119 = vsel %vm105, %v104, 0.0
    %v120 = vadd.f32 %v118, %v119
    %v121 = vld [vmem:[#allocation2] sm:$0x1]
    %v123 = vperm.slane %v121, 0
    %124 = vset.pattern.permute.xlu0 0
    %125 = vperm.xlu0 %124, %v123
    %v126 = vpop.permute.xlu0 %125
    %v128 = vadd.f32 %v120, %v126
    %v130 = vperm.slane %v32, 0
    %v132 = vmul.f32 %v130, 0.0
    %v134 = vperm.slane %v33, 0
    %v136 = vmul.f32 %v134, 0.0
    %v137 = vadd.f32 %v132, %v136
    %vm138 = vcmask 261120
    %v139 = vsel %vm138, %v137, 0.0
    %140 = vadd.xlane.f32.xlu0 %v139
    %v141 = vpop.xlane.xlu0 %140
    %v142 = vadd.f32 %v141, %v128
    %v143 = vsel %vm105, %v142, -inf
    %144 = vmax.xlane.f32.xlu0 %v143
    %v145 = vpop.xlane.xlu0 %144
    %v146 = vsub.f32 %v142, %v145
    %v147 = vmul.f32 %v146, 1.442695
    %v148 = vpow.pop %v147
    %v149 = vsel %vm105, %v148, 0.0
    %150 = vadd.xlane.f32.xlu0 %v149
    %v151 = vpop.xlane.xlu0 %150
    %v152 = vrcp.pop %v151
    %v153 = vmul.f32 %v148, %v152
    %v154 = vld [vmem:[%s0] sm:$0xff]
    %v155 = vmul.f32 %v153, %v154
    %v156 = vsel %vm105, %v155, 0.0
    %v157 = vpack.c.bf16 %v156, %v156
    %v159 = vperm.slane %v39, 0
    %v166 = vunpack.c.l.b16 %v34
    %v167 = vunpack.c.l.b16 %v35
    %v168 = vunpack.c.l.b16 %v36
    %v169 = vunpack.c.l.b16 %v37
    %v170 = vunpack.c.l.b16 %v38
    %v171 = vpack.c.b16 %v167, %v166
    %v172 = vpack.c.b16 %v169, %v168
    %v173 = vpack.c.b16 %v170, %v170
    %vm176 = vcmask 293888
    %v178 = vsel %vm176, %v157, 0
    %vm180 = vcmask 1041408
    %v182 = vsel %vm180, %v173, 0
    %184 = vmatpush.bf16.msra.mxu0 0
    %185 = vmatpush.bf16.msra.mxu0 0
    %186 = vmatpush.bf16.msra.mxu0 0
    %187 = vmatpush.bf16.msra.mxu0 0
    %188 = vmatpush.bf16.msra.mxu0 0
    %189 = vmatpush.bf16.msra.mxu0 %v182
    %190 = vmatpush.bf16.msra.mxu0 %v172
    %191 = vmatpush.bf16.msra.mxu0 %v171
    %192 = vmatmul.bf16.gmra.mxu0 %v178
    %v193 = vpop.f32.mrf.mxu0
    %v194 = vadd.f32 %v159, %v193
    %v195 = vpop.f32.mrf.mxu0
    %196 = vdwg.mxu0
    %v197 = vxor.u32 %v194, 2147483648
    %v198 = vmul.f32 %v197, 1.442695
    %v199 = vpow.pop %v198
    %v200 = vadd.f32 %v199, 1.0
    %v201 = vrcp.pop %v200
    %v202 = vmul.f32 %v200, %v201
    %v203 = vsub.f32 1.0, %v202
    %v204 = vmul.f32 %v201, %v203
    %v205 = vadd.f32 %v201, %v204
    %vm206 = vweird.f32 %v200
    %vm207 = vweird.f32 %v201
    %vm208 = vmor %vm206, %vm207
    %v209 = vsel %vm208, %v201, %v205
    %v210 = vand.u32 2147483647, %v200
    %vm211 = vcmp.eq.f32.partialorder %v210, 8.507059e+37
    %v212 = vand.u32 %v200, 2147483648
    %v213 = vor.u32 1.1754944e-38, %v212
    %v214 = vsel %vm211, %v213, %v209
    %v215 = vmul.f32 1.0, %v214
    %v216 = vtanh.pop %v194
    %v217 = vmul.f32 %v215, 0.0
    %219 = vrot.lane.b32.xlu0 %v216, 64
    %v220 = vpop.permute.xlu0 %219
    %v222 = vmul.f32 %v215, %v220
    %224 = vrot.lane.b32.xlu0 %v222, 32
    %v225 = vpop.permute.xlu0 %224
    %v227 = vadd.f32 %v217, %v225
    %v228 = vtanh.pop %v227
    %230 = vrot.lane.b32.xlu0 %v228, 64
    %v231 = vpop.permute.xlu0 %230
    %v233 = vmul.f32 %v215, %v231
    %234 = vst.msk [vmem:[%s7] sm:$0xff] %vm105, %v155
    %236 = vrot.lane.b32.xlu0 %v233, 32
    %v237 = vpop.permute.xlu0 %236
    %239 = vst.msk [vmem:[#allocation3] sm:$0xff] %vm138, %v237
    %240 = vrot.lane.b32.xlu0 %v130, 96
    %v241 = vpop.permute.xlu0 %240
    %v243 = vmul.f32 %v233, %v241
    %244 = vrot.lane.b32.xlu0 %v134, 32
    %v245 = vpop.permute.xlu0 %244
    %v247 = vmul.f32 %v227, %v245
    %249 = vrot.lane.b32.xlu0 %v247, 64
    %v250 = vpop.permute.xlu0 %249
    %v252 = vadd.f32 %v243, %v250
    %254 = vrot.lane.b32.xlu0 %v252, 32
    %v255 = vpop.permute.xlu0 %254
    %v257 = vsel %vm138, %v255, 0.0
    %258 = vadd.xlane.f32.xlu0 %v257
    %v259 = vpop.xlane.xlu0 %258
    %v260 = vadd.f32 %v259, %v128
    %v261 = vsel %vm105, %v260, -inf
    %262 = vmax.xlane.f32.xlu0 %v261
    %v263 = vpop.xlane.xlu0 %262
    %v264 = vsub.f32 %v260, %v263
    %v265 = vmul.f32 %v264, 1.442695
    %v266 = vpow.pop %v265
    %v267 = vsel %vm105, %v266, 0.0
    %268 = vadd.xlane.f32.xlu0 %v267
    %v269 = vpop.xlane.xlu0 %268
    %v270 = vrcp.pop %v269
    %v271 = vmul.f32 %v266, %v270
    %s272 = scalar_lea.vmem %s0, 8
    %v273 = vld [vmem:[%s272] sm:$0xff]
    %v274 = vmul.f32 %v271, %v273
    %275 = vrot.lane.b32.xlu0 %v233, 36
    %v276 = vpop.permute.xlu0 %275
    %v278 = vsel %vm105, %v274, %v276
    %v279 = vpack.c.bf16 %v278, %v278
    %v281 = vsel %vm176, %v279, 0
    %283 = vmatpush.bf16.msra.mxu0 0
    %284 = vmatpush.bf16.msra.mxu0 0
    %285 = vmatpush.bf16.msra.mxu0 0
    %286 = vmatpush.bf16.msra.mxu0 0
    %287 = vmatpush.bf16.msra.mxu0 0
    %288 = vmatpush.bf16.msra.mxu0 %v182
    %289 = vmatpush.bf16.msra.mxu0 %v172
    %290 = vmatpush.bf16.msra.mxu0 %v171
    %291 = vmatmul.bf16.gmra.mxu0 %v281
    %v292 = vpop.f32.mrf.mxu0
    %v293 = vadd.f32 %v159, %v292
    %v294 = vpop.f32.mrf.mxu0
    %295 = vdwg.mxu0
    %v296 = vxor.u32 %v293, 2147483648
    %v297 = vmul.f32 %v296, 1.442695
    %v298 = vpow.pop %v297
    %v299 = vadd.f32 %v298, 1.0
    %v300 = vrcp.pop %v299
    %v301 = vmul.f32 %v299, %v300
    %v302 = vsub.f32 1.0, %v301
    %v303 = vmul.f32 %v300, %v302
    %v304 = vadd.f32 %v300, %v303
    %vm305 = vweird.f32 %v299
    %vm306 = vweird.f32 %v300
    %vm307 = vmor %vm305, %vm306
    %v308 = vsel %vm307, %v300, %v304
    %v309 = vand.u32 2147483647, %v299
    %vm310 = vcmp.eq.f32.partialorder %v309, 8.507059e+37
    %v311 = vand.u32 %v299, 2147483648
    %v312 = vor.u32 1.1754944e-38, %v311
    %v313 = vsel %vm310, %v312, %v308
    %v314 = vmul.f32 1.0, %v313
    %v315 = vtanh.pop %v293
    %v316 = vmul.f32 %v314, %v227
    %318 = vrot.lane.b32.xlu0 %v315, 64
    %v319 = vpop.permute.xlu0 %318
    %v321 = vmul.f32 %v314, %v319
    %323 = vrot.lane.b32.xlu0 %v321, 32
    %v324 = vpop.permute.xlu0 %323
    %v326 = vadd.f32 %v316, %v324
    %v327 = vtanh.pop %v326
    %329 = vrot.lane.b32.xlu0 %v327, 64
    %v330 = vpop.permute.xlu0 %329
    %v332 = vmul.f32 %v314, %v330
    %s333 = scalar_lea.vmem %s7, 8
    %334 = vst.msk [vmem:[%s333] sm:$0xff] %vm105, %v274
    %336 = vrot.lane.b32.xlu0 %v332, 32
    %v337 = vpop.permute.xlu0 %336
    %s339 = scalar_lea.vmem [#allocation3], 8
    %340 = vst.msk [vmem:[%s339] sm:$0xff] %vm138, %v337
    %v341 = vmul.f32 %v332, %v241
    %v342 = vmul.f32 %v326, %v245
    %344 = vrot.lane.b32.xlu0 %v342, 64
    %v345 = vpop.permute.xlu0 %344
    %v347 = vadd.f32 %v341, %v345
    %349 = vrot.lane.b32.xlu0 %v347, 32
    %v350 = vpop.permute.xlu0 %349
    %v352 = vsel %vm138, %v350, 0.0
    %353 = vadd.xlane.f32.xlu0 %v352
    %v354 = vpop.xlane.xlu0 %353
    %v355 = vadd.f32 %v354, %v128
    %v356 = vsel %vm105, %v355, -inf
    %357 = vmax.xlane.f32.xlu0 %v356
    %v358 = vpop.xlane.xlu0 %357
    %v359 = vsub.f32 %v355, %v358
    %v360 = vmul.f32 %v359, 1.442695
    %v361 = vpow.pop %v360
    %v362 = vsel %vm105, %v361, 0.0
    %363 = vadd.xlane.f32.xlu0 %v362
    %v364 = vpop.xlane.xlu0 %363
    %v365 = vrcp.pop %v364
    %v366 = vmul.f32 %v361, %v365
    %s367 = scalar_lea.vmem %s0, 16
    %v368 = vld [vmem:[%s367] sm:$0xff]
    %v369 = vmul.f32 %v366, %v368
    %370 = vrot.lane.b32.xlu0 %v332, 36
    %v371 = vpop.permute.xlu0 %370
    %v373 = vsel %vm105, %v369, %v371
    %v374 = vpack.c.bf16 %v373, %v373
    %v376 = vsel %vm176, %v374, 0
    %378 = vmatpush.bf16.msra.mxu0 0
    %379 = vmatpush.bf16.msra.mxu0 0
    %380 = vmatpush.bf16.msra.mxu0 0
    %381 = vmatpush.bf16.msra.mxu0 0
    %382 = vmatpush.bf16.msra.mxu0 0
    %383 = vmatpush.bf16.msra.mxu0 %v182
    %384 = vmatpush.bf16.msra.mxu0 %v172
    %385 = vmatpush.bf16.msra.mxu0 %v171
    %386 = vmatmul.bf16.gmra.mxu0 %v376
    %v387 = vpop.f32.mrf.mxu0
    %v388 = vadd.f32 %v159, %v387
    %v389 = vpop.f32.mrf.mxu0
    %390 = vdwg.mxu0
    %v391 = vxor.u32 %v388, 2147483648
    %v392 = vmul.f32 %v391, 1.442695
    %v393 = vpow.pop %v392
    %v394 = vadd.f32 %v393, 1.0
    %v395 = vrcp.pop %v394
    %v396 = vmul.f32 %v394, %v395
    %v397 = vsub.f32 1.0, %v396
    %v398 = vmul.f32 %v395, %v397
    %v399 = vadd.f32 %v395, %v398
    %vm400 = vweird.f32 %v394
    %vm401 = vweird.f32 %v395
    %vm402 = vmor %vm400, %vm401
    %v403 = vsel %vm402, %v395, %v399
    %v404 = vand.u32 2147483647, %v394
    %vm405 = vcmp.eq.f32.partialorder %v404, 8.507059e+37
    %v406 = vand.u32 %v394, 2147483648
    %v407 = vor.u32 1.1754944e-38, %v406
    %v408 = vsel %vm405, %v407, %v403
    %v409 = vmul.f32 1.0, %v408
    %v410 = vtanh.pop %v388
    %v411 = vmul.f32 %v409, %v326
    %413 = vrot.lane.b32.xlu0 %v410, 64
    %v414 = vpop.permute.xlu0 %413
    %v416 = vmul.f32 %v409, %v414
    %418 = vrot.lane.b32.xlu0 %v416, 32
    %v419 = vpop.permute.xlu0 %418
    %v421 = vadd.f32 %v411, %v419
    %v422 = vtanh.pop %v421
    %424 = vrot.lane.b32.xlu0 %v422, 64
    %v425 = vpop.permute.xlu0 %424
    %v427 = vmul.f32 %v409, %v425
    %s428 = scalar_lea.vmem %s7, 16
    %429 = vst.msk [vmem:[%s428] sm:$0xff] %vm105, %v369
    %431 = vrot.lane.b32.xlu0 %v427, 32
    %v432 = vpop.permute.xlu0 %431
    %s434 = scalar_lea.vmem [#allocation3], 16
    %435 = vst.msk [vmem:[%s434] sm:$0xff] %vm138, %v432
    %v436 = vmul.f32 %v427, %v241
    %v437 = vmul.f32 %v421, %v245
    %439 = vrot.lane.b32.xlu0 %v437, 64
    %v440 = vpop.permute.xlu0 %439
    %v442 = vadd.f32 %v436, %v440
    %444 = vrot.lane.b32.xlu0 %v442, 32
    %v445 = vpop.permute.xlu0 %444
    %v447 = vsel %vm138, %v445, 0.0
    %448 = vadd.xlane.f32.xlu0 %v447
    %v449 = vpop.xlane.xlu0 %448
    %v450 = vadd.f32 %v449, %v128
    %v451 = vsel %vm105, %v450, -inf
    %452 = vmax.xlane.f32.xlu0 %v451
    %v453 = vpop.xlane.xlu0 %452
    %v454 = vsub.f32 %v450, %v453
    %v455 = vmul.f32 %v454, 1.442695
    %v456 = vpow.pop %v455
    %v457 = vsel %vm105, %v456, 0.0
    %458 = vadd.xlane.f32.xlu0 %v457
    %v459 = vpop.xlane.xlu0 %458
    %v460 = vrcp.pop %v459
    %v461 = vmul.f32 %v456, %v460
    %s462 = scalar_lea.vmem %s0, 24
    %v463 = vld [vmem:[%s462] sm:$0xff]
    %v464 = vmul.f32 %v461, %v463
    %465 = vrot.lane.b32.xlu0 %v427, 36
    %v466 = vpop.permute.xlu0 %465
    %v468 = vsel %vm105, %v464, %v466
    %v469 = vpack.c.bf16 %v468, %v468
    %v471 = vsel %vm176, %v469, 0
    %473 = vmatpush.bf16.msra.mxu0 0
    %474 = vmatpush.bf16.msra.mxu0 0
    %475 = vmatpush.bf16.msra.mxu0 0
    %476 = vmatpush.bf16.msra.mxu0 0
    %477 = vmatpush.bf16.msra.mxu0 0
    %478 = vmatpush.bf16.msra.mxu0 %v182
    %479 = vmatpush.bf16.msra.mxu0 %v172
    %480 = vmatpush.bf16.msra.mxu0 %v171
    %481 = vmatmul.bf16.gmra.mxu0 %v471
    %v482 = vpop.f32.mrf.mxu0
    %v483 = vadd.f32 %v159, %v482
    %v484 = vpop.f32.mrf.mxu0
    %485 = vdwg.mxu0
    %v486 = vxor.u32 %v483, 2147483648
    %v487 = vmul.f32 %v486, 1.442695
    %v488 = vpow.pop %v487
    %v489 = vadd.f32 %v488, 1.0
    %v490 = vrcp.pop %v489
    %v491 = vmul.f32 %v489, %v490
    %v492 = vsub.f32 1.0, %v491
    %v493 = vmul.f32 %v490, %v492
    %v494 = vadd.f32 %v490, %v493
    %vm495 = vweird.f32 %v489
    %vm496 = vweird.f32 %v490
    %vm497 = vmor %vm495, %vm496
    %v498 = vsel %vm497, %v490, %v494
    %v499 = vand.u32 2147483647, %v489
    %vm500 = vcmp.eq.f32.partialorder %v499, 8.507059e+37
    %v501 = vand.u32 %v489, 2147483648
    %v502 = vor.u32 1.1754944e-38, %v501
    %v503 = vsel %vm500, %v502, %v498
    %v504 = vmul.f32 1.0, %v503
    %v505 = vtanh.pop %v483
    %v506 = vmul.f32 %v504, %v421
    %508 = vrot.lane.b32.xlu0 %v505, 64
    %v509 = vpop.permute.xlu0 %508
    %v511 = vmul.f32 %v504, %v509
    %513 = vrot.lane.b32.xlu0 %v511, 32
    %v514 = vpop.permute.xlu0 %513
    %v516 = vadd.f32 %v506, %v514
    %v517 = vtanh.pop %v516
    %519 = vrot.lane.b32.xlu0 %v517, 64
    %v520 = vpop.permute.xlu0 %519
    %v522 = vmul.f32 %v504, %v520
    %s523 = scalar_lea.vmem %s7, 24
    %524 = vst.msk [vmem:[%s523] sm:$0xff] %vm105, %v464
    %526 = vrot.lane.b32.xlu0 %v522, 32
    %v527 = vpop.permute.xlu0 %526
    %s529 = scalar_lea.vmem [#allocation3], 24
    %530 = vst.msk [vmem:[%s529] sm:$0xff] %vm138, %v527
    %v531 = vmul.f32 %v522, %v241
    %v532 = vmul.f32 %v516, %v245
    %534 = vrot.lane.b32.xlu0 %v532, 64
    %v535 = vpop.permute.xlu0 %534
    %v537 = vadd.f32 %v531, %v535
    %539 = vrot.lane.b32.xlu0 %v537, 32
    %v540 = vpop.permute.xlu0 %539
    %v542 = vsel %vm138, %v540, 0.0
    %543 = vadd.xlane.f32.xlu0 %v542
    %v544 = vpop.xlane.xlu0 %543
    %v545 = vadd.f32 %v544, %v128
    %v546 = vsel %vm105, %v545, -inf
    %547 = vmax.xlane.f32.xlu0 %v546
    %v548 = vpop.xlane.xlu0 %547
    %v549 = vsub.f32 %v545, %v548
    %v550 = vmul.f32 %v549, 1.442695
    %v551 = vpow.pop %v550
    %v552 = vsel %vm105, %v551, 0.0
    %553 = vadd.xlane.f32.xlu0 %v552
    %v554 = vpop.xlane.xlu0 %553
    %v555 = vrcp.pop %v554
    %v556 = vmul.f32 %v551, %v555
    %s557 = scalar_lea.vmem %s0, 32
    %v558 = vld [vmem:[%s557] sm:$0xff]
    %v559 = vmul.f32 %v556, %v558
    %560 = vrot.lane.b32.xlu0 %v522, 36
    %v561 = vpop.permute.xlu0 %560
    %v563 = vsel %vm105, %v559, %v561
    %v564 = vpack.c.bf16 %v563, %v563
    %v566 = vsel %vm176, %v564, 0
    %568 = vmatpush.bf16.msra.mxu0 0
    %569 = vmatpush.bf16.msra.mxu0 0
    %570 = vmatpush.bf16.msra.mxu0 0
    %571 = vmatpush.bf16.msra.mxu0 0
    %572 = vmatpush.bf16.msra.mxu0 0
    %573 = vmatpush.bf16.msra.mxu0 %v182
    %574 = vmatpush.bf16.msra.mxu0 %v172
    %575 = vmatpush.bf16.msra.mxu0 %v171
    %576 = vmatmul.bf16.gmra.mxu0 %v566
    %v577 = vpop.f32.mrf.mxu0
    %v578 = vadd.f32 %v159, %v577
    %v579 = vpop.f32.mrf.mxu0
    %580 = vdwg.mxu0
    %v581 = vxor.u32 %v578, 2147483648
    %v582 = vmul.f32 %v581, 1.442695
    %v583 = vpow.pop %v582
    %v584 = vadd.f32 %v583, 1.0
    %v585 = vrcp.pop %v584
    %v586 = vmul.f32 %v584, %v585
    %v587 = vsub.f32 1.0, %v586
    %v588 = vmul.f32 %v585, %v587
    %v589 = vadd.f32 %v585, %v588
    %vm590 = vweird.f32 %v584
    %vm591 = vweird.f32 %v585
    %vm592 = vmor %vm590, %vm591
    %v593 = vsel %vm592, %v585, %v589
    %v594 = vand.u32 2147483647, %v584
    %vm595 = vcmp.eq.f32.partialorder %v594, 8.507059e+37
    %v596 = vand.u32 %v584, 2147483648
    %v597 = vor.u32 1.1754944e-38, %v596
    %v598 = vsel %vm595, %v597, %v593
    %v599 = vmul.f32 1.0, %v598
    %v600 = vtanh.pop %v578
    %v601 = vmul.f32 %v599, %v516
    %603 = vrot.lane.b32.xlu0 %v600, 64
    %v604 = vpop.permute.xlu0 %603
    %v606 = vmul.f32 %v599, %v604
    %608 = vrot.lane.b32.xlu0 %v606, 32
    %v609 = vpop.permute.xlu0 %608
    %v611 = vadd.f32 %v601, %v609
    %v612 = vtanh.pop %v611
    %614 = vrot.lane.b32.xlu0 %v612, 64
    %v615 = vpop.permute.xlu0 %614
    %v617 = vmul.f32 %v599, %v615
    %s618 = scalar_lea.vmem %s7, 32
    %619 = vst.msk [vmem:[%s618] sm:$0xff] %vm105, %v559
    %621 = vrot.lane.b32.xlu0 %v617, 32
    %v622 = vpop.permute.xlu0 %621
    %s624 = scalar_lea.vmem [#allocation3], 32
    %625 = vst.msk [vmem:[%s624] sm:$0xff] %vm138, %v622
    %v626 = vmul.f32 %v617, %v241
    %v627 = vmul.f32 %v611, %v245
    %629 = vrot.lane.b32.xlu0 %v627, 64
    %v630 = vpop.permute.xlu0 %629
    %v632 = vadd.f32 %v626, %v630
    %634 = vrot.lane.b32.xlu0 %v632, 32
    %v635 = vpop.permute.xlu0 %634
    %v637 = vsel %vm138, %v635, 0.0
    %638 = vadd.xlane.f32.xlu0 %v637
    %v639 = vpop.xlane.xlu0 %638
    %v640 = vadd.f32 %v639, %v128
    %v641 = vsel %vm105, %v640, -inf
    %642 = vmax.xlane.f32.xlu0 %v641
    %v643 = vpop.xlane.xlu0 %642
    %v644 = vsub.f32 %v640, %v643
    %v645 = vmul.f32 %v644, 1.442695
    %v646 = vpow.pop %v645
    %v647 = vsel %vm105, %v646, 0.0
    %648 = vadd.xlane.f32.xlu0 %v647
    %v649 = vpop.xlane.xlu0 %648
    %v650 = vrcp.pop %v649
    %v651 = vmul.f32 %v646, %v650
    %s652 = scalar_lea.vmem %s0, 40
    %v653 = vld [vmem:[%s652] sm:$0xff]
    %v654 = vmul.f32 %v651, %v653
    %655 = vrot.lane.b32.xlu0 %v617, 36
    %v656 = vpop.permute.xlu0 %655
    %v658 = vsel %vm105, %v654, %v656
    %v659 = vpack.c.bf16 %v658, %v658
    %v661 = vsel %vm176, %v659, 0
    %663 = vmatpush.bf16.msra.mxu0 0
    %664 = vmatpush.bf16.msra.mxu0 0
    %665 = vmatpush.bf16.msra.mxu0 0
    %666 = vmatpush.bf16.msra.mxu0 0
    %667 = vmatpush.bf16.msra.mxu0 0
    %668 = vmatpush.bf16.msra.mxu0 %v182
    %669 = vmatpush.bf16.msra.mxu0 %v172
    %670 = vmatpush.bf16.msra.mxu0 %v171
    %671 = vmatmul.bf16.gmra.mxu0 %v661
    %v672 = vpop.f32.mrf.mxu0
    %v673 = vadd.f32 %v159, %v672
    %v674 = vpop.f32.mrf.mxu0
    %675 = vdwg.mxu0
    %v676 = vxor.u32 %v673, 2147483648
    %v677 = vmul.f32 %v676, 1.442695
    %v678 = vpow.pop %v677
    %v679 = vadd.f32 %v678, 1.0
    %v680 = vrcp.pop %v679
    %v681 = vmul.f32 %v679, %v680
    %v682 = vsub.f32 1.0, %v681
    %v683 = vmul.f32 %v680, %v682
    %v684 = vadd.f32 %v680, %v683
    %vm685 = vweird.f32 %v679
    %vm686 = vweird.f32 %v680
    %vm687 = vmor %vm685, %vm686
    %v688 = vsel %vm687, %v680, %v684
    %v689 = vand.u32 2147483647, %v679
    %vm690 = vcmp.eq.f32.partialorder %v689, 8.507059e+37
    %v691 = vand.u32 %v679, 2147483648
    %v692 = vor.u32 1.1754944e-38, %v691
    %v693 = vsel %vm690, %v692, %v688
    %v694 = vmul.f32 1.0, %v693
    %v695 = vtanh.pop %v673
    %v696 = vmul.f32 %v694, %v611
    %698 = vrot.lane.b32.xlu0 %v695, 64
    %v699 = vpop.permute.xlu0 %698
    %v701 = vmul.f32 %v694, %v699
    %703 = vrot.lane.b32.xlu0 %v701, 32
    %v704 = vpop.permute.xlu0 %703
    %v706 = vadd.f32 %v696, %v704
    %v707 = vtanh.pop %v706
    %709 = vrot.lane.b32.xlu0 %v707, 64
    %v710 = vpop.permute.xlu0 %709
    %v712 = vmul.f32 %v694, %v710
    %s713 = scalar_lea.vmem %s7, 40
    %714 = vst.msk [vmem:[%s713] sm:$0xff] %vm105, %v654
    %716 = vrot.lane.b32.xlu0 %v712, 32
    %v717 = vpop.permute.xlu0 %716
    %s719 = scalar_lea.vmem [#allocation3], 40
    %720 = vst.msk [vmem:[%s719] sm:$0xff] %vm138, %v717
    %v721 = vmul.f32 %v712, %v241
    %v722 = vmul.f32 %v706, %v245
    %724 = vrot.lane.b32.xlu0 %v722, 64
    %v725 = vpop.permute.xlu0 %724
    %v727 = vadd.f32 %v721, %v725
    %729 = vrot.lane.b32.xlu0 %v727, 32
    %v730 = vpop.permute.xlu0 %729
    %v732 = vsel %vm138, %v730, 0.0
    %733 = vadd.xlane.f32.xlu0 %v732
    %v734 = vpop.xlane.xlu0 %733
    %v735 = vadd.f32 %v734, %v128
    %v736 = vsel %vm105, %v735, -inf
    %737 = vmax.xlane.f32.xlu0 %v736
    %v738 = vpop.xlane.xlu0 %737
    %v739 = vsub.f32 %v735, %v738
    %v740 = vmul.f32 %v739, 1.442695
    %v741 = vpow.pop %v740
    %v742 = vsel %vm105, %v741, 0.0
    %743 = vadd.xlane.f32.xlu0 %v742
    %v744 = vpop.xlane.xlu0 %743
    %v745 = vrcp.pop %v744
    %v746 = vmul.f32 %v741, %v745
    %s747 = scalar_lea.vmem %s0, 48
    %v748 = vld [vmem:[%s747] sm:$0xff]
    %v749 = vmul.f32 %v746, %v748
    %750 = vrot.lane.b32.xlu0 %v712, 36
    %v751 = vpop.permute.xlu0 %750
    %v753 = vsel %vm105, %v749, %v751
    %v754 = vpack.c.bf16 %v753, %v753
    %v756 = vsel %vm176, %v754, 0
    %758 = vmatpush.bf16.msra.mxu0 0
    %759 = vmatpush.bf16.msra.mxu0 0
    %760 = vmatpush.bf16.msra.mxu0 0
    %761 = vmatpush.bf16.msra.mxu0 0
    %762 = vmatpush.bf16.msra.mxu0 0
    %763 = vmatpush.bf16.msra.mxu0 %v182
    %764 = vmatpush.bf16.msra.mxu0 %v172
    %765 = vmatpush.bf16.msra.mxu0 %v171
    %766 = vmatmul.bf16.gmra.mxu0 %v756
    %v767 = vpop.f32.mrf.mxu0
    %v768 = vadd.f32 %v159, %v767
    %v769 = vpop.f32.mrf.mxu0
    %770 = vdwg.mxu0
    %v771 = vxor.u32 %v768, 2147483648
    %v772 = vmul.f32 %v771, 1.442695
    %v773 = vpow.pop %v772
    %v774 = vadd.f32 %v773, 1.0
    %v775 = vrcp.pop %v774
    %v776 = vmul.f32 %v774, %v775
    %v777 = vsub.f32 1.0, %v776
    %v778 = vmul.f32 %v775, %v777
    %v779 = vadd.f32 %v775, %v778
    %vm780 = vweird.f32 %v774
    %vm781 = vweird.f32 %v775
    %vm782 = vmor %vm780, %vm781
    %v783 = vsel %vm782, %v775, %v779
    %v784 = vand.u32 2147483647, %v774
    %vm785 = vcmp.eq.f32.partialorder %v784, 8.507059e+37
    %v786 = vand.u32 %v774, 2147483648
    %v787 = vor.u32 1.1754944e-38, %v786
    %v788 = vsel %vm785, %v787, %v783
    %v789 = vmul.f32 1.0, %v788
    %v790 = vtanh.pop %v768
    %v791 = vmul.f32 %v789, %v706
    %793 = vrot.lane.b32.xlu0 %v790, 64
    %v794 = vpop.permute.xlu0 %793
    %v796 = vmul.f32 %v789, %v794
    %798 = vrot.lane.b32.xlu0 %v796, 32
    %v799 = vpop.permute.xlu0 %798
    %v801 = vadd.f32 %v791, %v799
    %v802 = vtanh.pop %v801
    %804 = vrot.lane.b32.xlu0 %v802, 64
    %v805 = vpop.permute.xlu0 %804
    %v807 = vmul.f32 %v789, %v805
    %s808 = scalar_lea.vmem %s7, 48
    %809 = vst.msk [vmem:[%s808] sm:$0xff] %vm105, %v749
    %811 = vrot.lane.b32.xlu0 %v807, 32
    %v812 = vpop.permute.xlu0 %811
    %s814 = scalar_lea.vmem [#allocation3], 48
    %815 = vst.msk [vmem:[%s814] sm:$0xff] %vm138, %v812
    %v816 = vmul.f32 %v807, %v241
    %v817 = vmul.f32 %v801, %v245
    %819 = vrot.lane.b32.xlu0 %v817, 64
    %v820 = vpop.permute.xlu0 %819
    %v822 = vadd.f32 %v816, %v820
    %824 = vrot.lane.b32.xlu0 %v822, 32
    %v825 = vpop.permute.xlu0 %824
    %v827 = vsel %vm138, %v825, 0.0
    %828 = vadd.xlane.f32.xlu0 %v827
    %v829 = vpop.xlane.xlu0 %828
    %v830 = vadd.f32 %v829, %v128
    %v831 = vsel %vm105, %v830, -inf
    %832 = vmax.xlane.f32.xlu0 %v831
    %v833 = vpop.xlane.xlu0 %832
    %v834 = vsub.f32 %v830, %v833
    %v835 = vmul.f32 %v834, 1.442695
    %v836 = vpow.pop %v835
    %v837 = vsel %vm105, %v836, 0.0
    %838 = vadd.xlane.f32.xlu0 %v837
    %v839 = vpop.xlane.xlu0 %838
    %v840 = vrcp.pop %v839
    %v841 = vmul.f32 %v836, %v840
    %s842 = scalar_lea.vmem %s0, 56
    %v843 = vld [vmem:[%s842] sm:$0xff]
    %v844 = vmul.f32 %v841, %v843
    %845 = vrot.lane.b32.xlu0 %v807, 36
    %v846 = vpop.permute.xlu0 %845
    %v848 = vsel %vm105, %v844, %v846
    %v849 = vpack.c.bf16 %v848, %v848
    %v851 = vsel %vm176, %v849, 0
    %853 = vmatpush.bf16.msra.mxu0 0
    %854 = vmatpush.bf16.msra.mxu0 0
    %855 = vmatpush.bf16.msra.mxu0 0
    %856 = vmatpush.bf16.msra.mxu0 0
    %857 = vmatpush.bf16.msra.mxu0 0
    %858 = vmatpush.bf16.msra.mxu0 %v182
    %859 = vmatpush.bf16.msra.mxu0 %v172
    %860 = vmatpush.bf16.msra.mxu0 %v171
    %861 = vmatmul.bf16.gmra.mxu0 %v851
    %v862 = vpop.f32.mrf.mxu0
    %v863 = vadd.f32 %v159, %v862
    %v864 = vpop.f32.mrf.mxu0
    %865 = vdwg.mxu0
    %v866 = vxor.u32 %v863, 2147483648
    %v867 = vmul.f32 %v866, 1.442695
    %v868 = vpow.pop %v867
    %v869 = vadd.f32 %v868, 1.0
    %v870 = vrcp.pop %v869
    %v871 = vmul.f32 %v869, %v870
    %v872 = vsub.f32 1.0, %v871
    %v873 = vmul.f32 %v870, %v872
    %v874 = vadd.f32 %v870, %v873
    %vm875 = vweird.f32 %v869
    %vm876 = vweird.f32 %v870
    %vm877 = vmor %vm875, %vm876
    %v878 = vsel %vm877, %v870, %v874
    %v879 = vand.u32 2147483647, %v869
    %vm880 = vcmp.eq.f32.partialorder %v879, 8.507059e+37
    %v881 = vand.u32 %v869, 2147483648
    %v882 = vor.u32 1.1754944e-38, %v881
    %v883 = vsel %vm880, %v882, %v878
    %v884 = vmul.f32 1.0, %v883
    %v885 = vtanh.pop %v863
    %v886 = vmul.f32 %v884, %v801
    %888 = vrot.lane.b32.xlu0 %v885, 64
    %v889 = vpop.permute.xlu0 %888
    %v891 = vmul.f32 %v884, %v889
    %893 = vrot.lane.b32.xlu0 %v891, 32
    %v894 = vpop.permute.xlu0 %893
    %v896 = vadd.f32 %v886, %v894
    %v897 = vtanh.pop %v896
    %899 = vrot.lane.b32.xlu0 %v897, 64
    %v900 = vpop.permute.xlu0 %899
    %v902 = vmul.f32 %v884, %v900
    %s903 = scalar_lea.vmem %s7, 56
    %904 = vst.msk [vmem:[%s903] sm:$0xff] %vm105, %v844
    %906 = vrot.lane.b32.xlu0 %v902, 32
    %v907 = vpop.permute.xlu0 %906
    %s909 = scalar_lea.vmem [#allocation3], 56
    %910 = vst.msk [vmem:[%s909] sm:$0xff] %vm138, %v907
    // Predicated region
    $region30: #{tpu_custom_call.1} parent=1 // pred_check
      _
    $region31: #{tpu_custom_call.1} parent=1 // pred_check_branch
      %912 = sbr.rel (0) target = $region33
    $region32: #{tpu_custom_call.1} parent=1 // pred_region
      _
    $region33: #{tpu_custom_call.1} parent=1 // pred_fallthru
      _
    // Predicated region
    $region34: #{tpu_custom_call.1} parent=1 // pred_check
      _
    $region35: #{tpu_custom_call.1} parent=1 // pred_check_branch
      %914 = sbr.rel (0) target = $region37
    $region36: #{tpu_custom_call.1} parent=1 // pred_region
      %916 = vsyncadd [#allocation4], 0
      %s917 = sshll.u32 [#allocation3], 4
      %s918 = int_to_ptr.vmem [resolvable:$true] %s917
      %s919 = sshll.u32 %s8, 4
      %s920 = int_to_ptr.hbm [resolvable:$true] %s919
      %925 = dma.vmem_to_hbm [thread:$0]  %s918, 1024, %s920, [#allocation4], 128, 128, 8
    $region37: #{tpu_custom_call.1} parent=1 // pred_fallthru
      _
    // Predicated region
    $region38: #{tpu_custom_call.1} parent=1 // pred_check
      _
    $region39: #{tpu_custom_call.1} parent=1 // pred_check_branch
      %927 = sbr.rel (0) target = $region41
    $region40: #{tpu_custom_call.1} parent=1 // pred_region
      _
    $region41: #{tpu_custom_call.1} parent=1 // pred_fallthru
      _
    // Predicated region
    $region42: #{tpu_custom_call.1} parent=1 // pred_check
      _
    $region43: #{tpu_custom_call.1} parent=1 // pred_check_branch
      %929 = sbr.rel (0) target = $region45
    $region44: #{tpu_custom_call.1} parent=1 // pred_region
      %931 = dma.done [#allocation4], 1024
    $region45: #{tpu_custom_call.1} parent=1 // pred_fallthru
      _
    %932 = vsyncpa [#allocation4], 1

</llo_original>
